<compile_context>
chip_gen: v5e
topology: v5e:2x2
jax: 0.10.0
libtpu: 0.0.40
codegen_flags: <defaults>
</compile_context>

<pallas_src>
import functools

import jax
import jax.numpy as jnp
from jax.experimental import pallas as pl
from jax.experimental.pallas import tpu as pltpu


def lstm_kernel(x_ref, wih_ref, whh_ref, b_ref, wfc_ref, bfc_ref, out_ref):
    TB = out_ref.shape[0]          # batch tile (sublane multiple)
    T = x_ref.shape[1]             # static sequence length
    Hp = whh_ref.shape[0]          # padded hidden size (lane multiple)

    # Hoist invariant loads / broadcasts out of the time loop (JAX does not CSE them).
    x_all = x_ref[...].astype(jnp.bfloat16)                       # (TB, T, I)
    w_ih = wih_ref[...]                                           # (I, 4Hp)  bf16
    w_hh = whh_ref[...]                                           # (Hp, 4Hp) bf16
    bias = jnp.broadcast_to(b_ref[...], (TB, 4 * Hp))             # (TB, 4Hp) f32

    h = jnp.zeros((TB, Hp), jnp.float32)
    c = jnp.zeros((TB, Hp), jnp.float32)

    # Fully unrolled static time loop: every slice below has a static index, so it is
    # a plain lane/sublane-aligned view (equivalent to lax.fori_loop(..., unroll=True)
    # for this small, static T).
    for t in range(T):
        x_t = x_all[:, t, :]                                      # (TB, I)
        gates = (
            jnp.dot(x_t, w_ih, preferred_element_type=jnp.float32)
            + jnp.dot(h.astype(jnp.bfloat16), w_hh, preferred_element_type=jnp.float32)
            + bias
        )                                                         # (TB, 4Hp) f32
        # PyTorch gate order i, f, g, o — each gate is a 128-lane-aligned slab.
        i_g = jax.nn.sigmoid(gates[:, 0 * Hp:1 * Hp])
        f_g = jax.nn.sigmoid(gates[:, 1 * Hp:2 * Hp])
        g_g = jnp.tanh(gates[:, 2 * Hp:3 * Hp])
        o_g = jax.nn.sigmoid(gates[:, 3 * Hp:4 * Hp])
        c = f_g * c + i_g * g_g
        h = o_g * jnp.tanh(c)

    # Final FC + sigmoid on the last hidden state (lane-dense padded output block).
    logits = (
        jnp.dot(h.astype(jnp.bfloat16), wfc_ref[...], preferred_element_type=jnp.float32)
        + bfc_ref[...]
    )
    out_ref[...] = jax.nn.sigmoid(logits)


def _round_up(n, m):
    return ((n + m - 1) // m) * m


def _pack_gate_weights(w, hidden, hidden_pad):
    """PyTorch gate-stacked weight (4H, D) -> (D, 4*Hp) with each gate in its own
    128-lane-aligned slab (zero padded beyond H)."""
    d = w.shape[1]
    w4 = w.reshape(4, hidden, d)                                   # (4, H, D)
    w4 = jnp.transpose(w4, (0, 2, 1))                              # (4, D, H)
    w4 = jnp.pad(w4, ((0, 0), (0, 0), (0, hidden_pad - hidden)))   # (4, D, Hp)
    return jnp.transpose(w4, (1, 0, 2)).reshape(d, 4 * hidden_pad)


@functools.partial(jax.jit, static_argnames=("batch_tile",))
def lstm_model_forward(x, w_ih, w_hh, b_ih, b_hh, w_fc, b_fc, *, batch_tile=256):
    """x: (B, T, I) batch-first, like the PyTorch module.  Returns (B, O) float32."""
    B, T, I = x.shape
    H = w_hh.shape[1]
    O = w_fc.shape[0]

    LANE, SUB = 128, 8
    Hp = _round_up(H, LANE)                 # gate-aligned hidden size
    Op = _round_up(O, LANE)                 # lane-dense output width
    TB = min(_round_up(B, SUB), batch_tile)  # batch tile (>= one sublane group)
    Bp = _round_up(_round_up(B, SUB), TB)    # padded batch

    # Padded inputs (batch-first layout kept: no extra HBM transpose pass over x).
    x_p = jnp.pad(x.astype(jnp.bfloat16), ((0, Bp - B), (0, 0), (0, 0)))

    # Gate-aligned, padded, pre-transposed weights (bf16 operands for the MXU).
    # Zero padding keeps the padded hidden units identically zero through the
    # recurrence (their gate pre-activations are 0 -> g=tanh(0)=0, c stays 0).
    wih_p = _pack_gate_weights(w_ih, H, Hp).astype(jnp.bfloat16)                 # (I,  4Hp)
    whh_p = jnp.pad(_pack_gate_weights(w_hh, H, Hp),
                    ((0, Hp - H), (0, 0))).astype(jnp.bfloat16)                  # (Hp, 4Hp)
    bias = jnp.pad((b_ih + b_hh).reshape(4, H), ((0, 0), (0, Hp - H)))
    bias = bias.reshape(1, 4 * Hp).astype(jnp.float32)                           # (1,  4Hp)
    wfc_p = jnp.pad(jnp.transpose(w_fc),
                    ((0, Hp - H), (0, Op - O))).astype(jnp.bfloat16)             # (Hp, Op)
    bfc_p = jnp.pad(b_fc, ((0, Op - O),)).reshape(1, Op).astype(jnp.float32)     # (1,  Op)

    grid_spec = pltpu.PrefetchScalarGridSpec(
        num_scalar_prefetch=0,
        grid=(Bp // TB,),                                    # independent batch tiles
        in_specs=[
            pl.BlockSpec((TB, T, I), lambda b: (b, 0, 0)),   # input batch tile (whole T)
            pl.BlockSpec((I, 4 * Hp), lambda b: (0, 0)),     # W_ih^T (resident)
            pl.BlockSpec((Hp, 4 * Hp), lambda b: (0, 0)),    # W_hh^T (resident)
            pl.BlockSpec((1, 4 * Hp), lambda b: (0, 0)),     # combined LSTM bias
            pl.BlockSpec((Hp, Op), lambda b: (0, 0)),        # W_fc^T
            pl.BlockSpec((1, Op), lambda b: (0, 0)),         # b_fc
        ],
        out_specs=pl.BlockSpec((TB, Op), lambda b: (b, 0)),  # lane-dense output tile
    )

    out = pl.pallas_call(
        lstm_kernel,
        out_shape=jax.ShapeDtypeStruct((Bp, Op), jnp.float32),
        grid_spec=grid_spec,
        compiler_params=pltpu.CompilerParams(
            # Batch tiles are independent -> "parallel" lets v7x use both TensorCores.
            dimension_semantics=("parallel",)),
    )(x_p, wih_p, whh_p, bias, wfc_p, bfc_p)

    return out[:B, :O]


def lstm_model_reference(x, w_ih, w_hh, b_ih, b_hh, w_fc, b_fc):
    """Pure-JAX f32 reference mirroring torch.nn.LSTM + Linear + Sigmoid."""
    B, T, I = x.shape
    H = w_hh.shape[1]
    bias = b_ih + b_hh

    def step(carry, x_t):
        h, c = carry
        gates = x_t @ w_ih.T + h @ w_hh.T + bias
        i = jax.nn.sigmoid(gates[:, 0 * H:1 * H])
        f = jax.nn.sigmoid(gates[:, 1 * H:2 * H])
        g = jnp.tanh(gates[:, 2 * H:3 * H])
        o = jax.nn.sigmoid(gates[:, 3 * H:4 * H])
        c = f * c + i * g
        h = o * jnp.tanh(c)
        return (h, c), None

    h0 = jnp.zeros((B, H), jnp.float32)
    c0 = jnp.zeros((B, H), jnp.float32)
    (h_last, _), _ = jax.lax.scan(step, (h0, c0), jnp.transpose(x, (1, 0, 2)))
    return jax.nn.sigmoid(h_last @ w_fc.T + b_fc)


if __name__ == "__main__":
    # Small shapes consistent with the module's forward.
    B, T, I, H, O = 2, 8, 16, 32, 1

    key = jax.random.PRNGKey(0)
    ks = jax.random.split(key, 7)
    scale = 1.0 / jnp.sqrt(H)   # matches PyTorch's uniform(-1/sqrt(H), 1/sqrt(H)) init range
    w_ih = jax.random.uniform(ks[0], (4 * H, I), jnp.float32, -scale, scale)
    w_hh = jax.random.uniform(ks[1], (4 * H, H), jnp.float32, -scale, scale)
    b_ih = jax.random.uniform(ks[2], (4 * H,), jnp.float32, -scale, scale)
    b_hh = jax.random.uniform(ks[3], (4 * H,), jnp.float32, -scale, scale)
    w_fc = jax.random.uniform(ks[4], (O, H), jnp.float32, -scale, scale)
    b_fc = jax.random.uniform(ks[5], (O,), jnp.float32, -scale, scale)
    x = jax.random.normal(ks[6], (B, T, I), jnp.float32)

    out = lstm_model_forward(x, w_ih, w_hh, b_ih, b_hh, w_fc, b_fc)
    out = jax.block_until_ready(out)

    ref = lstm_model_reference(x, w_ih, w_hh, b_ih, b_hh, w_fc, b_fc)
    assert out.shape == (B, O)
    # bf16 MXU operands with f32 accumulation -> small tolerance vs the f32 reference.
    assert jnp.allclose(out, ref, atol=2e-2, rtol=2e-2), (out, ref)

    print("KERNEL_OK")
</pallas_src>

<mosaic_0001>
module attributes {stable_mosaic.version = 11 : i64} {
  func.func @lstm_kernel(%arg0: i32, %arg1: memref<8x8x16xbf16, #tpu.memory_space<vmem>>, %arg2: memref<16x512xbf16, #tpu.memory_space<vmem>>, %arg3: memref<128x512xbf16, #tpu.memory_space<vmem>>, %arg4: memref<1x512xf32, #tpu.memory_space<vmem>>, %arg5: memref<128x128xbf16, #tpu.memory_space<vmem>>, %arg6: memref<1x128xf32, #tpu.memory_space<vmem>>, %arg7: memref<8x128xf32, #tpu.memory_space<vmem>>) attributes {dimension_semantics = [#tpu.dimension_semantics<parallel>], iteration_bounds = array<i64: 1>, scalar_prefetch = 0 : i64, scratch_operands = 0 : i64, tpu.core_type = #tpu.core_type<tc>, window_params = [{transform_indices = @transform_0, window_bounds = array<i64: 8, 8, 16>}, {pipeline_mode = #tpu.pipeline_mode<synchronous>, transform_indices = @transform_1, window_bounds = array<i64: 16, 512>}, {pipeline_mode = #tpu.pipeline_mode<synchronous>, transform_indices = @transform_2, window_bounds = array<i64: 128, 512>}, {pipeline_mode = #tpu.pipeline_mode<synchronous>, transform_indices = @transform_3, window_bounds = array<i64: 1, 512>}, {pipeline_mode = #tpu.pipeline_mode<synchronous>, transform_indices = @transform_4, window_bounds = array<i64: 128, 128>}, {pipeline_mode = #tpu.pipeline_mode<synchronous>, transform_indices = @transform_5, window_bounds = array<i64: 1, 128>}, {transform_indices = @transform_6, window_bounds = array<i64: 8, 128>}]} {
    %c0 = arith.constant 0 : index
    %c0_0 = arith.constant 0 : index
    %c0_1 = arith.constant 0 : index
    %0 = vector.load %arg1[%c0, %c0_0, %c0_1] : memref<8x8x16xbf16, #tpu.memory_space<vmem>>, vector<8x8x16xbf16>
    %c0_2 = arith.constant 0 : index
    %c0_3 = arith.constant 0 : index
    %1 = vector.load %arg2[%c0_2, %c0_3] : memref<16x512xbf16, #tpu.memory_space<vmem>>, vector<16x512xbf16>
    %c0_4 = arith.constant 0 : index
    %c0_5 = arith.constant 0 : index
    %2 = vector.load %arg3[%c0_4, %c0_5] : memref<128x512xbf16, #tpu.memory_space<vmem>>, vector<128x512xbf16>
    %c0_6 = arith.constant 0 : index
    %c0_7 = arith.constant 0 : index
    %3 = vector.load %arg4[%c0_6, %c0_7] : memref<1x512xf32, #tpu.memory_space<vmem>>, vector<1x512xf32>
    %4 = vector.shape_cast %3 : vector<1x512xf32> to vector<1x512xf32>
    %5 = vector.broadcast %4 : vector<1x512xf32> to vector<8x512xf32>
    %cst = arith.constant 0.000000e+00 : f32
    %6 = vector.broadcast %cst : f32 to vector<8x128xf32>
    %cst_8 = arith.constant 0.000000e+00 : f32
    %7 = vector.broadcast %cst_8 : f32 to vector<8x128xf32>
    %8 = vector.extract_strided_slice %0 {offsets = [0, 0, 0], sizes = [8, 1, 16], strides = [1, 1, 1]} : vector<8x8x16xbf16> to vector<8x1x16xbf16>
    %9 = vector.shape_cast %8 : vector<8x1x16xbf16> to vector<8x16xbf16>
    %cst_9 = arith.constant dense<0.000000e+00> : vector<8x512xf32>
    %10 = tpu.matmul %9, %1, %cst_9 {dimension_numbers = #tpu.dot_dimension_numbers<[1], [0], [0], [1], [0, 0, 1, 1], [], []>} : vector<8x16xbf16>, vector<16x512xbf16>, vector<8x512xf32> -> vector<8x512xf32>
    %11 = arith.truncf %6 : vector<8x128xf32> to vector<8x128xbf16>
    %cst_10 = arith.constant dense<0.000000e+00> : vector<8x512xf32>
    %12 = tpu.matmul %11, %2, %cst_10 {dimension_numbers = #tpu.dot_dimension_numbers<[1], [0], [0], [1], [0, 0, 1, 1], [], []>} : vector<8x128xbf16>, vector<128x512xbf16>, vector<8x512xf32> -> vector<8x512xf32>
    %13 = arith.addf %10, %12 : vector<8x512xf32>
    %14 = arith.addf %13, %5 : vector<8x512xf32>
    %15 = vector.extract_strided_slice %14 {offsets = [0, 0], sizes = [8, 128], strides = [1, 1]} : vector<8x512xf32> to vector<8x128xf32>
    %16 = arith.negf %15 : vector<8x128xf32>
    %17 = math.exp %16 : vector<8x128xf32>
    %cst_11 = arith.constant 1.000000e+00 : f32
    %18 = vector.broadcast %cst_11 : f32 to vector<8x128xf32>
    %19 = arith.addf %18, %17 : vector<8x128xf32>
    %20 = arith.divf %18, %19 : vector<8x128xf32>
    %21 = vector.extract_strided_slice %14 {offsets = [0, 128], sizes = [8, 128], strides = [1, 1]} : vector<8x512xf32> to vector<8x128xf32>
    %22 = arith.negf %21 : vector<8x128xf32>
    %23 = math.exp %22 : vector<8x128xf32>
    %cst_12 = arith.constant 1.000000e+00 : f32
    %24 = vector.broadcast %cst_12 : f32 to vector<8x128xf32>
    %25 = arith.addf %24, %23 : vector<8x128xf32>
    %26 = arith.divf %24, %25 : vector<8x128xf32>
    %27 = vector.extract_strided_slice %14 {offsets = [0, 256], sizes = [8, 128], strides = [1, 1]} : vector<8x512xf32> to vector<8x128xf32>
    %28 = math.tanh %27 : vector<8x128xf32>
    %29 = vector.extract_strided_slice %14 {offsets = [0, 384], sizes = [8, 128], strides = [1, 1]} : vector<8x512xf32> to vector<8x128xf32>
    %30 = arith.negf %29 : vector<8x128xf32>
    %31 = math.exp %30 : vector<8x128xf32>
    %cst_13 = arith.constant 1.000000e+00 : f32
    %32 = vector.broadcast %cst_13 : f32 to vector<8x128xf32>
    %33 = arith.addf %32, %31 : vector<8x128xf32>
    %34 = arith.divf %32, %33 : vector<8x128xf32>
    %35 = arith.mulf %26, %7 : vector<8x128xf32>
    %36 = arith.mulf %20, %28 : vector<8x128xf32>
    %37 = arith.addf %35, %36 : vector<8x128xf32>
    %38 = math.tanh %37 : vector<8x128xf32>
    %39 = arith.mulf %34, %38 : vector<8x128xf32>
    %40 = vector.extract_strided_slice %0 {offsets = [0, 1, 0], sizes = [8, 1, 16], strides = [1, 1, 1]} : vector<8x8x16xbf16> to vector<8x1x16xbf16>
    %41 = vector.shape_cast %40 : vector<8x1x16xbf16> to vector<8x16xbf16>
    %cst_14 = arith.constant dense<0.000000e+00> : vector<8x512xf32>
    %42 = tpu.matmul %41, %1, %cst_14 {dimension_numbers = #tpu.dot_dimension_numbers<[1], [0], [0], [1], [0, 0, 1, 1], [], []>} : vector<8x16xbf16>, vector<16x512xbf16>, vector<8x512xf32> -> vector<8x512xf32>
    %43 = arith.truncf %39 : vector<8x128xf32> to vector<8x128xbf16>
    %cst_15 = arith.constant dense<0.000000e+00> : vector<8x512xf32>
    %44 = tpu.matmul %43, %2, %cst_15 {dimension_numbers = #tpu.dot_dimension_numbers<[1], [0], [0], [1], [0, 0, 1, 1], [], []>} : vector<8x128xbf16>, vector<128x512xbf16>, vector<8x512xf32> -> vector<8x512xf32>
    %45 = arith.addf %42, %44 : vector<8x512xf32>
    %46 = arith.addf %45, %5 : vector<8x512xf32>
    %47 = vector.extract_strided_slice %46 {offsets = [0, 0], sizes = [8, 128], strides = [1, 1]} : vector<8x512xf32> to vector<8x128xf32>
    %48 = arith.negf %47 : vector<8x128xf32>
    %49 = math.exp %48 : vector<8x128xf32>
    %cst_16 = arith.constant 1.000000e+00 : f32
    %50 = vector.broadcast %cst_16 : f32 to vector<8x128xf32>
    %51 = arith.addf %50, %49 : vector<8x128xf32>
    %52 = arith.divf %50, %51 : vector<8x128xf32>
    %53 = vector.extract_strided_slice %46 {offsets = [0, 128], sizes = [8, 128], strides = [1, 1]} : vector<8x512xf32> to vector<8x128xf32>
    %54 = arith.negf %53 : vector<8x128xf32>
    %55 = math.exp %54 : vector<8x128xf32>
    %cst_17 = arith.constant 1.000000e+00 : f32
    %56 = vector.broadcast %cst_17 : f32 to vector<8x128xf32>
    %57 = arith.addf %56, %55 : vector<8x128xf32>
    %58 = arith.divf %56, %57 : vector<8x128xf32>
    %59 = vector.extract_strided_slice %46 {offsets = [0, 256], sizes = [8, 128], strides = [1, 1]} : vector<8x512xf32> to vector<8x128xf32>
    %60 = math.tanh %59 : vector<8x128xf32>
    %61 = vector.extract_strided_slice %46 {offsets = [0, 384], sizes = [8, 128], strides = [1, 1]} : vector<8x512xf32> to vector<8x128xf32>
    %62 = arith.negf %61 : vector<8x128xf32>
    %63 = math.exp %62 : vector<8x128xf32>
    %cst_18 = arith.constant 1.000000e+00 : f32
    %64 = vector.broadcast %cst_18 : f32 to vector<8x128xf32>
    %65 = arith.addf %64, %63 : vector<8x128xf32>
    %66 = arith.divf %64, %65 : vector<8x128xf32>
    %67 = arith.mulf %58, %37 : vector<8x128xf32>
    %68 = arith.mulf %52, %60 : vector<8x128xf32>
    %69 = arith.addf %67, %68 : vector<8x128xf32>
    %70 = math.tanh %69 : vector<8x128xf32>
    %71 = arith.mulf %66, %70 : vector<8x128xf32>
    %72 = vector.extract_strided_slice %0 {offsets = [0, 2, 0], sizes = [8, 1, 16], strides = [1, 1, 1]} : vector<8x8x16xbf16> to vector<8x1x16xbf16>
    %73 = vector.shape_cast %72 : vector<8x1x16xbf16> to vector<8x16xbf16>
    %cst_19 = arith.constant dense<0.000000e+00> : vector<8x512xf32>
    %74 = tpu.matmul %73, %1, %cst_19 {dimension_numbers = #tpu.dot_dimension_numbers<[1], [0], [0], [1], [0, 0, 1, 1], [], []>} : vector<8x16xbf16>, vector<16x512xbf16>, vector<8x512xf32> -> vector<8x512xf32>
    %75 = arith.truncf %71 : vector<8x128xf32> to vector<8x128xbf16>
    %cst_20 = arith.constant dense<0.000000e+00> : vector<8x512xf32>
    %76 = tpu.matmul %75, %2, %cst_20 {dimension_numbers = #tpu.dot_dimension_numbers<[1], [0], [0], [1], [0, 0, 1, 1], [], []>} : vector<8x128xbf16>, vector<128x512xbf16>, vector<8x512xf32> -> vector<8x512xf32>
    %77 = arith.addf %74, %76 : vector<8x512xf32>
    %78 = arith.addf %77, %5 : vector<8x512xf32>
    %79 = vector.extract_strided_slice %78 {offsets = [0, 0], sizes = [8, 128], strides = [1, 1]} : vector<8x512xf32> to vector<8x128xf32>
    %80 = arith.negf %79 : vector<8x128xf32>
    %81 = math.exp %80 : vector<8x128xf32>
    %cst_21 = arith.constant 1.000000e+00 : f32
    %82 = vector.broadcast %cst_21 : f32 to vector<8x128xf32>
    %83 = arith.addf %82, %81 : vector<8x128xf32>
    %84 = arith.divf %82, %83 : vector<8x128xf32>
    %85 = vector.extract_strided_slice %78 {offsets = [0, 128], sizes = [8, 128], strides = [1, 1]} : vector<8x512xf32> to vector<8x128xf32>
    %86 = arith.negf %85 : vector<8x128xf32>
    %87 = math.exp %86 : vector<8x128xf32>
    %cst_22 = arith.constant 1.000000e+00 : f32
    %88 = vector.broadcast %cst_22 : f32 to vector<8x128xf32>
    %89 = arith.addf %88, %87 : vector<8x128xf32>
    %90 = arith.divf %88, %89 : vector<8x128xf32>
    %91 = vector.extract_strided_slice %78 {offsets = [0, 256], sizes = [8, 128], strides = [1, 1]} : vector<8x512xf32> to vector<8x128xf32>
    %92 = math.tanh %91 : vector<8x128xf32>
    %93 = vector.extract_strided_slice %78 {offsets = [0, 384], sizes = [8, 128], strides = [1, 1]} : vector<8x512xf32> to vector<8x128xf32>
    %94 = arith.negf %93 : vector<8x128xf32>
    %95 = math.exp %94 : vector<8x128xf32>
    %cst_23 = arith.constant 1.000000e+00 : f32
    %96 = vector.broadcast %cst_23 : f32 to vector<8x128xf32>
    %97 = arith.addf %96, %95 : vector<8x128xf32>
    %98 = arith.divf %96, %97 : vector<8x128xf32>
    %99 = arith.mulf %90, %69 : vector<8x128xf32>
    %100 = arith.mulf %84, %92 : vector<8x128xf32>
    %101 = arith.addf %99, %100 : vector<8x128xf32>
    %102 = math.tanh %101 : vector<8x128xf32>
    %103 = arith.mulf %98, %102 : vector<8x128xf32>
    %104 = vector.extract_strided_slice %0 {offsets = [0, 3, 0], sizes = [8, 1, 16], strides = [1, 1, 1]} : vector<8x8x16xbf16> to vector<8x1x16xbf16>
    %105 = vector.shape_cast %104 : vector<8x1x16xbf16> to vector<8x16xbf16>
    %cst_24 = arith.constant dense<0.000000e+00> : vector<8x512xf32>
    %106 = tpu.matmul %105, %1, %cst_24 {dimension_numbers = #tpu.dot_dimension_numbers<[1], [0], [0], [1], [0, 0, 1, 1], [], []>} : vector<8x16xbf16>, vector<16x512xbf16>, vector<8x512xf32> -> vector<8x512xf32>
    %107 = arith.truncf %103 : vector<8x128xf32> to vector<8x128xbf16>
    %cst_25 = arith.constant dense<0.000000e+00> : vector<8x512xf32>
    %108 = tpu.matmul %107, %2, %cst_25 {dimension_numbers = #tpu.dot_dimension_numbers<[1], [0], [0], [1], [0, 0, 1, 1], [], []>} : vector<8x128xbf16>, vector<128x512xbf16>, vector<8x512xf32> -> vector<8x512xf32>
    %109 = arith.addf %106, %108 : vector<8x512xf32>
    %110 = arith.addf %109, %5 : vector<8x512xf32>
    %111 = vector.extract_strided_slice %110 {offsets = [0, 0], sizes = [8, 128], strides = [1, 1]} : vector<8x512xf32> to vector<8x128xf32>
    %112 = arith.negf %111 : vector<8x128xf32>
    %113 = math.exp %112 : vector<8x128xf32>
    %cst_26 = arith.constant 1.000000e+00 : f32
    %114 = vector.broadcast %cst_26 : f32 to vector<8x128xf32>
    %115 = arith.addf %114, %113 : vector<8x128xf32>
    %116 = arith.divf %114, %115 : vector<8x128xf32>
    %117 = vector.extract_strided_slice %110 {offsets = [0, 128], sizes = [8, 128], strides = [1, 1]} : vector<8x512xf32> to vector<8x128xf32>
    %118 = arith.negf %117 : vector<8x128xf32>
    %119 = math.exp %118 : vector<8x128xf32>
    %cst_27 = arith.constant 1.000000e+00 : f32
    %120 = vector.broadcast %cst_27 : f32 to vector<8x128xf32>
    %121 = arith.addf %120, %119 : vector<8x128xf32>
    %122 = arith.divf %120, %121 : vector<8x128xf32>
    %123 = vector.extract_strided_slice %110 {offsets = [0, 256], sizes = [8, 128], strides = [1, 1]} : vector<8x512xf32> to vector<8x128xf32>
    %124 = math.tanh %123 : vector<8x128xf32>
    %125 = vector.extract_strided_slice %110 {offsets = [0, 384], sizes = [8, 128], strides = [1, 1]} : vector<8x512xf32> to vector<8x128xf32>
    %126 = arith.negf %125 : vector<8x128xf32>
    %127 = math.exp %126 : vector<8x128xf32>
    %cst_28 = arith.constant 1.000000e+00 : f32
    %128 = vector.broadcast %cst_28 : f32 to vector<8x128xf32>
    %129 = arith.addf %128, %127 : vector<8x128xf32>
    %130 = arith.divf %128, %129 : vector<8x128xf32>
    %131 = arith.mulf %122, %101 : vector<8x128xf32>
    %132 = arith.mulf %116, %124 : vector<8x128xf32>
    %133 = arith.addf %131, %132 : vector<8x128xf32>
    %134 = math.tanh %133 : vector<8x128xf32>
    %135 = arith.mulf %130, %134 : vector<8x128xf32>
    %136 = vector.extract_strided_slice %0 {offsets = [0, 4, 0], sizes = [8, 1, 16], strides = [1, 1, 1]} : vector<8x8x16xbf16> to vector<8x1x16xbf16>
    %137 = vector.shape_cast %136 : vector<8x1x16xbf16> to vector<8x16xbf16>
    %cst_29 = arith.constant dense<0.000000e+00> : vector<8x512xf32>
    %138 = tpu.matmul %137, %1, %cst_29 {dimension_numbers = #tpu.dot_dimension_numbers<[1], [0], [0], [1], [0, 0, 1, 1], [], []>} : vector<8x16xbf16>, vector<16x512xbf16>, vector<8x512xf32> -> vector<8x512xf32>
    %139 = arith.truncf %135 : vector<8x128xf32> to vector<8x128xbf16>
    %cst_30 = arith.constant dense<0.000000e+00> : vector<8x512xf32>
    %140 = tpu.matmul %139, %2, %cst_30 {dimension_numbers = #tpu.dot_dimension_numbers<[1], [0], [0], [1], [0, 0, 1, 1], [], []>} : vector<8x128xbf16>, vector<128x512xbf16>, vector<8x512xf32> -> vector<8x512xf32>
    %141 = arith.addf %138, %140 : vector<8x512xf32>
    %142 = arith.addf %141, %5 : vector<8x512xf32>
    %143 = vector.extract_strided_slice %142 {offsets = [0, 0], sizes = [8, 128], strides = [1, 1]} : vector<8x512xf32> to vector<8x128xf32>
    %144 = arith.negf %143 : vector<8x128xf32>
    %145 = math.exp %144 : vector<8x128xf32>
    %cst_31 = arith.constant 1.000000e+00 : f32
    %146 = vector.broadcast %cst_31 : f32 to vector<8x128xf32>
    %147 = arith.addf %146, %145 : vector<8x128xf32>
    %148 = arith.divf %146, %147 : vector<8x128xf32>
    %149 = vector.extract_strided_slice %142 {offsets = [0, 128], sizes = [8, 128], strides = [1, 1]} : vector<8x512xf32> to vector<8x128xf32>
    %150 = arith.negf %149 : vector<8x128xf32>
    %151 = math.exp %150 : vector<8x128xf32>
    %cst_32 = arith.constant 1.000000e+00 : f32
    %152 = vector.broadcast %cst_32 : f32 to vector<8x128xf32>
    %153 = arith.addf %152, %151 : vector<8x128xf32>
    %154 = arith.divf %152, %153 : vector<8x128xf32>
    %155 = vector.extract_strided_slice %142 {offsets = [0, 256], sizes = [8, 128], strides = [1, 1]} : vector<8x512xf32> to vector<8x128xf32>
    %156 = math.tanh %155 : vector<8x128xf32>
    %157 = vector.extract_strided_slice %142 {offsets = [0, 384], sizes = [8, 128], strides = [1, 1]} : vector<8x512xf32> to vector<8x128xf32>
    %158 = arith.negf %157 : vector<8x128xf32>
    %159 = math.exp %158 : vector<8x128xf32>
    %cst_33 = arith.constant 1.000000e+00 : f32
    %160 = vector.broadcast %cst_33 : f32 to vector<8x128xf32>
    %161 = arith.addf %160, %159 : vector<8x128xf32>
    %162 = arith.divf %160, %161 : vector<8x128xf32>
    %163 = arith.mulf %154, %133 : vector<8x128xf32>
    %164 = arith.mulf %148, %156 : vector<8x128xf32>
    %165 = arith.addf %163, %164 : vector<8x128xf32>
    %166 = math.tanh %165 : vector<8x128xf32>
    %167 = arith.mulf %162, %166 : vector<8x128xf32>
    %168 = vector.extract_strided_slice %0 {offsets = [0, 5, 0], sizes = [8, 1, 16], strides = [1, 1, 1]} : vector<8x8x16xbf16> to vector<8x1x16xbf16>
    %169 = vector.shape_cast %168 : vector<8x1x16xbf16> to vector<8x16xbf16>
    %cst_34 = arith.constant dense<0.000000e+00> : vector<8x512xf32>
    %170 = tpu.matmul %169, %1, %cst_34 {dimension_numbers = #tpu.dot_dimension_numbers<[1], [0], [0], [1], [0, 0, 1, 1], [], []>} : vector<8x16xbf16>, vector<16x512xbf16>, vector<8x512xf32> -> vector<8x512xf32>
    %171 = arith.truncf %167 : vector<8x128xf32> to vector<8x128xbf16>
    %cst_35 = arith.constant dense<0.000000e+00> : vector<8x512xf32>
    %172 = tpu.matmul %171, %2, %cst_35 {dimension_numbers = #tpu.dot_dimension_numbers<[1], [0], [0], [1], [0, 0, 1, 1], [], []>} : vector<8x128xbf16>, vector<128x512xbf16>, vector<8x512xf32> -> vector<8x512xf32>
    %173 = arith.addf %170, %172 : vector<8x512xf32>
    %174 = arith.addf %173, %5 : vector<8x512xf32>
    %175 = vector.extract_strided_slice %174 {offsets = [0, 0], sizes = [8, 128], strides = [1, 1]} : vector<8x512xf32> to vector<8x128xf32>
    %176 = arith.negf %175 : vector<8x128xf32>
    %177 = math.exp %176 : vector<8x128xf32>
    %cst_36 = arith.constant 1.000000e+00 : f32
    %178 = vector.broadcast %cst_36 : f32 to vector<8x128xf32>
    %179 = arith.addf %178, %177 : vector<8x128xf32>
    %180 = arith.divf %178, %179 : vector<8x128xf32>
    %181 = vector.extract_strided_slice %174 {offsets = [0, 128], sizes = [8, 128], strides = [1, 1]} : vector<8x512xf32> to vector<8x128xf32>
    %182 = arith.negf %181 : vector<8x128xf32>
    %183 = math.exp %182 : vector<8x128xf32>
    %cst_37 = arith.constant 1.000000e+00 : f32
    %184 = vector.broadcast %cst_37 : f32 to vector<8x128xf32>
    %185 = arith.addf %184, %183 : vector<8x128xf32>
    %186 = arith.divf %184, %185 : vector<8x128xf32>
    %187 = vector.extract_strided_slice %174 {offsets = [0, 256], sizes = [8, 128], strides = [1, 1]} : vector<8x512xf32> to vector<8x128xf32>
    %188 = math.tanh %187 : vector<8x128xf32>
    %189 = vector.extract_strided_slice %174 {offsets = [0, 384], sizes = [8, 128], strides = [1, 1]} : vector<8x512xf32> to vector<8x128xf32>
    %190 = arith.negf %189 : vector<8x128xf32>
    %191 = math.exp %190 : vector<8x128xf32>
    %cst_38 = arith.constant 1.000000e+00 : f32
    %192 = vector.broadcast %cst_38 : f32 to vector<8x128xf32>
    %193 = arith.addf %192, %191 : vector<8x128xf32>
    %194 = arith.divf %192, %193 : vector<8x128xf32>
    %195 = arith.mulf %186, %165 : vector<8x128xf32>
    %196 = arith.mulf %180, %188 : vector<8x128xf32>
    %197 = arith.addf %195, %196 : vector<8x128xf32>
    %198 = math.tanh %197 : vector<8x128xf32>
    %199 = arith.mulf %194, %198 : vector<8x128xf32>
    %200 = vector.extract_strided_slice %0 {offsets = [0, 6, 0], sizes = [8, 1, 16], strides = [1, 1, 1]} : vector<8x8x16xbf16> to vector<8x1x16xbf16>
    %201 = vector.shape_cast %200 : vector<8x1x16xbf16> to vector<8x16xbf16>
    %cst_39 = arith.constant dense<0.000000e+00> : vector<8x512xf32>
    %202 = tpu.matmul %201, %1, %cst_39 {dimension_numbers = #tpu.dot_dimension_numbers<[1], [0], [0], [1], [0, 0, 1, 1], [], []>} : vector<8x16xbf16>, vector<16x512xbf16>, vector<8x512xf32> -> vector<8x512xf32>
    %203 = arith.truncf %199 : vector<8x128xf32> to vector<8x128xbf16>
    %cst_40 = arith.constant dense<0.000000e+00> : vector<8x512xf32>
    %204 = tpu.matmul %203, %2, %cst_40 {dimension_numbers = #tpu.dot_dimension_numbers<[1], [0], [0], [1], [0, 0, 1, 1], [], []>} : vector<8x128xbf16>, vector<128x512xbf16>, vector<8x512xf32> -> vector<8x512xf32>
    %205 = arith.addf %202, %204 : vector<8x512xf32>
    %206 = arith.addf %205, %5 : vector<8x512xf32>
    %207 = vector.extract_strided_slice %206 {offsets = [0, 0], sizes = [8, 128], strides = [1, 1]} : vector<8x512xf32> to vector<8x128xf32>
    %208 = arith.negf %207 : vector<8x128xf32>
    %209 = math.exp %208 : vector<8x128xf32>
    %cst_41 = arith.constant 1.000000e+00 : f32
    %210 = vector.broadcast %cst_41 : f32 to vector<8x128xf32>
    %211 = arith.addf %210, %209 : vector<8x128xf32>
    %212 = arith.divf %210, %211 : vector<8x128xf32>
    %213 = vector.extract_strided_slice %206 {offsets = [0, 128], sizes = [8, 128], strides = [1, 1]} : vector<8x512xf32> to vector<8x128xf32>
    %214 = arith.negf %213 : vector<8x128xf32>
    %215 = math.exp %214 : vector<8x128xf32>
    %cst_42 = arith.constant 1.000000e+00 : f32
    %216 = vector.broadcast %cst_42 : f32 to vector<8x128xf32>
    %217 = arith.addf %216, %215 : vector<8x128xf32>
    %218 = arith.divf %216, %217 : vector<8x128xf32>
    %219 = vector.extract_strided_slice %206 {offsets = [0, 256], sizes = [8, 128], strides = [1, 1]} : vector<8x512xf32> to vector<8x128xf32>
    %220 = math.tanh %219 : vector<8x128xf32>
    %221 = vector.extract_strided_slice %206 {offsets = [0, 384], sizes = [8, 128], strides = [1, 1]} : vector<8x512xf32> to vector<8x128xf32>
    %222 = arith.negf %221 : vector<8x128xf32>
    %223 = math.exp %222 : vector<8x128xf32>
    %cst_43 = arith.constant 1.000000e+00 : f32
    %224 = vector.broadcast %cst_43 : f32 to vector<8x128xf32>
    %225 = arith.addf %224, %223 : vector<8x128xf32>
    %226 = arith.divf %224, %225 : vector<8x128xf32>
    %227 = arith.mulf %218, %197 : vector<8x128xf32>
    %228 = arith.mulf %212, %220 : vector<8x128xf32>
    %229 = arith.addf %227, %228 : vector<8x128xf32>
    %230 = math.tanh %229 : vector<8x128xf32>
    %231 = arith.mulf %226, %230 : vector<8x128xf32>
    %232 = vector.extract_strided_slice %0 {offsets = [0, 7, 0], sizes = [8, 1, 16], strides = [1, 1, 1]} : vector<8x8x16xbf16> to vector<8x1x16xbf16>
    %233 = vector.shape_cast %232 : vector<8x1x16xbf16> to vector<8x16xbf16>
    %cst_44 = arith.constant dense<0.000000e+00> : vector<8x512xf32>
    %234 = tpu.matmul %233, %1, %cst_44 {dimension_numbers = #tpu.dot_dimension_numbers<[1], [0], [0], [1], [0, 0, 1, 1], [], []>} : vector<8x16xbf16>, vector<16x512xbf16>, vector<8x512xf32> -> vector<8x512xf32>
    %235 = arith.truncf %231 : vector<8x128xf32> to vector<8x128xbf16>
    %cst_45 = arith.constant dense<0.000000e+00> : vector<8x512xf32>
    %236 = tpu.matmul %235, %2, %cst_45 {dimension_numbers = #tpu.dot_dimension_numbers<[1], [0], [0], [1], [0, 0, 1, 1], [], []>} : vector<8x128xbf16>, vector<128x512xbf16>, vector<8x512xf32> -> vector<8x512xf32>
    %237 = arith.addf %234, %236 : vector<8x512xf32>
    %238 = arith.addf %237, %5 : vector<8x512xf32>
    %239 = vector.extract_strided_slice %238 {offsets = [0, 0], sizes = [8, 128], strides = [1, 1]} : vector<8x512xf32> to vector<8x128xf32>
    %240 = arith.negf %239 : vector<8x128xf32>
    %241 = math.exp %240 : vector<8x128xf32>
    %cst_46 = arith.constant 1.000000e+00 : f32
    %242 = vector.broadcast %cst_46 : f32 to vector<8x128xf32>
    %243 = arith.addf %242, %241 : vector<8x128xf32>
    %244 = arith.divf %242, %243 : vector<8x128xf32>
    %245 = vector.extract_strided_slice %238 {offsets = [0, 128], sizes = [8, 128], strides = [1, 1]} : vector<8x512xf32> to vector<8x128xf32>
    %246 = arith.negf %245 : vector<8x128xf32>
    %247 = math.exp %246 : vector<8x128xf32>
    %cst_47 = arith.constant 1.000000e+00 : f32
    %248 = vector.broadcast %cst_47 : f32 to vector<8x128xf32>
    %249 = arith.addf %248, %247 : vector<8x128xf32>
    %250 = arith.divf %248, %249 : vector<8x128xf32>
    %251 = vector.extract_strided_slice %238 {offsets = [0, 256], sizes = [8, 128], strides = [1, 1]} : vector<8x512xf32> to vector<8x128xf32>
    %252 = math.tanh %251 : vector<8x128xf32>
    %253 = vector.extract_strided_slice %238 {offsets = [0, 384], sizes = [8, 128], strides = [1, 1]} : vector<8x512xf32> to vector<8x128xf32>
    %254 = arith.negf %253 : vector<8x128xf32>
    %255 = math.exp %254 : vector<8x128xf32>
    %cst_48 = arith.constant 1.000000e+00 : f32
    %256 = vector.broadcast %cst_48 : f32 to vector<8x128xf32>
    %257 = arith.addf %256, %255 : vector<8x128xf32>
    %258 = arith.divf %256, %257 : vector<8x128xf32>
    %259 = arith.mulf %250, %229 : vector<8x128xf32>
    %260 = arith.mulf %244, %252 : vector<8x128xf32>
    %261 = arith.addf %259, %260 : vector<8x128xf32>
    %262 = math.tanh %261 : vector<8x128xf32>
    %263 = arith.mulf %258, %262 : vector<8x128xf32>
    %264 = arith.truncf %263 : vector<8x128xf32> to vector<8x128xbf16>
    %c0_49 = arith.constant 0 : index
    %c0_50 = arith.constant 0 : index
    %265 = vector.load %arg5[%c0_49, %c0_50] : memref<128x128xbf16, #tpu.memory_space<vmem>>, vector<128x128xbf16>
    %cst_51 = arith.constant dense<0.000000e+00> : vector<8x128xf32>
    %266 = tpu.matmul %264, %265, %cst_51 {dimension_numbers = #tpu.dot_dimension_numbers<[1], [0], [0], [1], [0, 0, 1, 1], [], []>} : vector<8x128xbf16>, vector<128x128xbf16>, vector<8x128xf32> -> vector<8x128xf32>
    %c0_52 = arith.constant 0 : index
    %c0_53 = arith.constant 0 : index
    %267 = vector.load %arg6[%c0_52, %c0_53] : memref<1x128xf32, #tpu.memory_space<vmem>>, vector<1x128xf32>
    %268 = vector.broadcast %267 : vector<1x128xf32> to vector<8x128xf32>
    %269 = arith.addf %266, %268 : vector<8x128xf32>
    %270 = arith.negf %269 : vector<8x128xf32>
    %271 = math.exp %270 : vector<8x128xf32>
    %cst_54 = arith.constant 1.000000e+00 : f32
    %272 = vector.broadcast %cst_54 : f32 to vector<8x128xf32>
    %273 = arith.addf %272, %271 : vector<8x128xf32>
    %274 = arith.divf %272, %273 : vector<8x128xf32>
    %c0_55 = arith.constant 0 : index
    %c0_56 = arith.constant 0 : index
    %275 = vector.load %arg7[%c0_55, %c0_56] : memref<8x128xf32, #tpu.memory_space<vmem>>, vector<8x128xf32>
    tpu.vector_store %arg7[%c0_55, %c0_56], %274 {strides = array<i32>} : memref<8x128xf32, #tpu.memory_space<vmem>>, vector<8x128xf32>,
    return
  }
  func.func @transform_0(%arg0: i32) -> (i32, i32, i32) {
    %c0_i32 = arith.constant 0 : i32
    %c0_i32_0 = arith.constant 0 : i32
    %c0_i32_1 = arith.constant 0 : i32
    return %arg0, %c0_i32, %c0_i32_0 : i32, i32, i32
  }
  func.func @transform_1(%arg0: i32) -> (i32, i32) {
    %c0_i32 = arith.constant 0 : i32
    %c0_i32_0 = arith.constant 0 : i32
    %c0_i32_1 = arith.constant 0 : i32
    return %c0_i32, %c0_i32_0 : i32, i32
  }
  func.func @transform_2(%arg0: i32) -> (i32, i32) {
    %c0_i32 = arith.constant 0 : i32
    %c0_i32_0 = arith.constant 0 : i32
    %c0_i32_1 = arith.constant 0 : i32
    return %c0_i32, %c0_i32_0 : i32, i32
  }
  func.func @transform_3(%arg0: i32) -> (i32, i32) {
    %c0_i32 = arith.constant 0 : i32
    %c0_i32_0 = arith.constant 0 : i32
    %c0_i32_1 = arith.constant 0 : i32
    return %c0_i32, %c0_i32_0 : i32, i32
  }
  func.func @transform_4(%arg0: i32) -> (i32, i32) {
    %c0_i32 = arith.constant 0 : i32
    %c0_i32_0 = arith.constant 0 : i32
    %c0_i32_1 = arith.constant 0 : i32
    return %c0_i32, %c0_i32_0 : i32, i32
  }
  func.func @transform_5(%arg0: i32) -> (i32, i32) {
    %c0_i32 = arith.constant 0 : i32
    %c0_i32_0 = arith.constant 0 : i32
    %c0_i32_1 = arith.constant 0 : i32
    return %c0_i32, %c0_i32_0 : i32, i32
  }
  func.func @transform_6(%arg0: i32) -> (i32, i32) {
    %c0_i32 = arith.constant 0 : i32
    %c0_i32_0 = arith.constant 0 : i32
    return %arg0, %c0_i32 : i32, i32
  }
}

</mosaic_0001>

<llo_original>
// kernel: lstm_model_forward.1
$region0: #{lstm_model_forward.1}
  #allocation0 [shape = 'u32[]', space=smem, size = 0x4, offset = 0x4, fixed_abs, tag = 'smem constant byte address 0x4 - core index']
  #allocation1 [shape = 'u32[72,128]{1,0:T(1,128)}', space=vmem, size = 0x9000, scoped, tag = 'internal scratch']
  %s0 = inlined_call_operand.vmem [shape: bf16[8,8,16], index: 0, kind: input, shape index: {}]
  %s1 = inlined_call_operand.vmem [shape: bf16[16,512], index: 1, kind: input, shape index: {}]
  %s2 = inlined_call_operand.vmem [shape: bf16[128,512], index: 2, kind: input, shape index: {}]
  %s3 = inlined_call_operand.vmem [shape: f32[1,512], index: 3, kind: input, shape index: {}]
  %s4 = inlined_call_operand.vmem [shape: bf16[128,128], index: 4, kind: input, shape index: {}]
  %s5 = inlined_call_operand.vmem [shape: f32[1,128], index: 5, kind: input, shape index: {}]
  %s6 = inlined_call_operand.vmem [shape: f32[8,128], index: 6, kind: output, shape index: {}]
  %s7 = sld [smem:[#allocation0]]
  $region34: #{lstm_model_forward.1} parent=0
    _
  %s9 = ssub.s32 1, %s7
  %s10 = scalar_select 0, %s9, %s7
  // Predicated region
  $region2: #{lstm_model_forward.1} parent=0 // pred_check
    _
  $region3: #{lstm_model_forward.1} parent=0 // pred_check_branch
    %12 = sbr.rel (0) target = $region5
  $region4: #{lstm_model_forward.1} parent=0 // pred_region
    _
  $region5: #{lstm_model_forward.1} parent=0 // pred_fallthru
    _
  // Predicated region
  $region6: #{lstm_model_forward.1} parent=0 // pred_check
    _
  $region7: #{lstm_model_forward.1} parent=0 // pred_check_branch
    %14 = sbr.rel (0) target = $region9
  $region8: #{lstm_model_forward.1} parent=0 // pred_region
    _
  $region9: #{lstm_model_forward.1} parent=0 // pred_fallthru
    _
  // Predicated region
  $region10: #{lstm_model_forward.1} parent=0 // pred_check
    _
  $region11: #{lstm_model_forward.1} parent=0 // pred_check_branch
    %16 = sbr.rel (0) target = $region13
  $region12: #{lstm_model_forward.1} parent=0 // pred_region
    _
  $region13: #{lstm_model_forward.1} parent=0 // pred_fallthru
    _
  // Predicated region
  $region14: #{lstm_model_forward.1} parent=0 // pred_check
    _
  $region15: #{lstm_model_forward.1} parent=0 // pred_check_branch
    %18 = sbr.rel (0) target = $region17
  $region16: #{lstm_model_forward.1} parent=0 // pred_region
    _
  $region17: #{lstm_model_forward.1} parent=0 // pred_fallthru
    _
  // Predicated region
  $region18: #{lstm_model_forward.1} parent=0 // pred_check
    _
  $region19: #{lstm_model_forward.1} parent=0 // pred_check_branch
    %20 = sbr.rel (0) target = $region21
  $region20: #{lstm_model_forward.1} parent=0 // pred_region
    _
  $region21: #{lstm_model_forward.1} parent=0 // pred_fallthru
    _
  // Predicated region
  $region22: #{lstm_model_forward.1} parent=0 // pred_check
    _
  $region23: #{lstm_model_forward.1} parent=0 // pred_check_branch
    %22 = sbr.rel (0) target = $region25
  $region24: #{lstm_model_forward.1} parent=0 // pred_region
    _
  $region25: #{lstm_model_forward.1} parent=0 // pred_fallthru
    _
  %v24 = vld [vmem:[%s0] sm:$0xf]
  %v25 = vld [vmem:[%s0 + $0x4] sm:$0xf]
  %v26 = vld [vmem:[%s0 + $0x8] sm:$0xf]
  %v27 = vld [vmem:[%s0 + $0xc] sm:$0xf]
  %v28 = vld [vmem:[%s0 + $0x10] sm:$0xf]
  %v29 = vld [vmem:[%s0 + $0x14] sm:$0xf]
  %v30 = vld [vmem:[%s0 + $0x18] sm:$0xf]
  %v31 = vld [vmem:[%s0 + $0x1c] sm:$0xf]
  %v32 = vld [vmem:[%s1] sm:$0xff]
  %v33 = vld [vmem:[%s1 + $0x8] sm:$0xff]
  %v34 = vld [vmem:[%s1 + $0x10] sm:$0xff]
  %v35 = vld [vmem:[%s1 + $0x18] sm:$0xff]
  %v36 = vld [vmem:[%s2] sm:$0xff]
  %v37 = vld [vmem:[%s2 + $0x8] sm:$0xff]
  %v38 = vld [vmem:[%s2 + $0x10] sm:$0xff]
  %v39 = vld [vmem:[%s2 + $0x18] sm:$0xff]
  %v40 = vld [vmem:[%s2 + $0x20] sm:$0xff]
  %v41 = vld [vmem:[%s2 + $0x28] sm:$0xff]
  %v42 = vld [vmem:[%s2 + $0x30] sm:$0xff]
  %v43 = vld [vmem:[%s2 + $0x38] sm:$0xff]
  %v44 = vld [vmem:[%s2 + $0x40] sm:$0xff]
  %v45 = vld [vmem:[%s2 + $0x48] sm:$0xff]
  %v46 = vld [vmem:[%s2 + $0x50] sm:$0xff]
  %v47 = vld [vmem:[%s2 + $0x58] sm:$0xff]
  %v48 = vld [vmem:[%s2 + $0x60] sm:$0xff]
  %v49 = vld [vmem:[%s2 + $0x68] sm:$0xff]
  %v50 = vld [vmem:[%s2 + $0x70] sm:$0xff]
  %v51 = vld [vmem:[%s2 + $0x78] sm:$0xff]
  %v52 = vld [vmem:[%s2 + $0x80] sm:$0xff]
  %v53 = vld [vmem:[%s2 + $0x88] sm:$0xff]
  %v54 = vld [vmem:[%s2 + $0x90] sm:$0xff]
  %v55 = vld [vmem:[%s2 + $0x98] sm:$0xff]
  %v56 = vld [vmem:[%s2 + $0xa0] sm:$0xff]
  %v57 = vld [vmem:[%s2 + $0xa8] sm:$0xff]
  %v58 = vld [vmem:[%s2 + $0xb0] sm:$0xff]
  %v59 = vld [vmem:[%s2 + $0xb8] sm:$0xff]
  %v60 = vld [vmem:[%s2 + $0xc0] sm:$0xff]
  %v61 = vld [vmem:[%s2 + $0xc8] sm:$0xff]
  %v62 = vld [vmem:[%s2 + $0xd0] sm:$0xff]
  %v63 = vld [vmem:[%s2 + $0xd8] sm:$0xff]
  %v64 = vld [vmem:[%s2 + $0xe0] sm:$0xff]
  %v65 = vld [vmem:[%s2 + $0xe8] sm:$0xff]
  %v66 = vld [vmem:[%s2 + $0xf0] sm:$0xff]
  %v67 = vld [vmem:[%s2 + $0xf8] sm:$0xff]
  %v68 = vld [vmem:[%s3] sm:$0xf]
  %v70 = vperm.slane %v68, 0
  %v71 = vperm.slane %v68, 1
  %v72 = vperm.slane %v68, 2
  %v73 = vperm.slane %v68, 3
  %v110 = vunpack.c.l.b16 %v36
  %v111 = vunpack.c.h.b16 %v36
  %v112 = vunpack.c.l.b16 %v37
  %v113 = vunpack.c.h.b16 %v37
  %v114 = vunpack.c.l.b16 %v38
  %v115 = vunpack.c.h.b16 %v38
  %v116 = vunpack.c.l.b16 %v39
  %v117 = vunpack.c.h.b16 %v39
  %v118 = vunpack.c.l.b16 %v40
  %v119 = vunpack.c.h.b16 %v40
  %v120 = vunpack.c.l.b16 %v41
  %v121 = vunpack.c.h.b16 %v41
  %v122 = vunpack.c.l.b16 %v42
  %v123 = vunpack.c.h.b16 %v42
  %v124 = vunpack.c.l.b16 %v43
  %v125 = vunpack.c.h.b16 %v43
  %v126 = vunpack.c.l.b16 %v44
  %v127 = vunpack.c.h.b16 %v44
  %v128 = vunpack.c.l.b16 %v45
  %v129 = vunpack.c.h.b16 %v45
  %v130 = vunpack.c.l.b16 %v46
  %v131 = vunpack.c.h.b16 %v46
  %v132 = vunpack.c.l.b16 %v47
  %v133 = vunpack.c.h.b16 %v47
  %v134 = vunpack.c.l.b16 %v48
  %v135 = vunpack.c.h.b16 %v48
  %v136 = vunpack.c.l.b16 %v49
  %v137 = vunpack.c.h.b16 %v49
  %v138 = vunpack.c.l.b16 %v50
  %v139 = vunpack.c.h.b16 %v50
  %v140 = vunpack.c.l.b16 %v51
  %v141 = vunpack.c.h.b16 %v51
  %v142 = vunpack.c.l.b16 %v52
  %v143 = vunpack.c.h.b16 %v52
  %v144 = vunpack.c.l.b16 %v53
  %v145 = vunpack.c.h.b16 %v53
  %v146 = vunpack.c.l.b16 %v54
  %v147 = vunpack.c.h.b16 %v54
  %v148 = vunpack.c.l.b16 %v55
  %v149 = vunpack.c.h.b16 %v55
  %v150 = vunpack.c.l.b16 %v56
  %v151 = vunpack.c.h.b16 %v56
  %v152 = vunpack.c.l.b16 %v57
  %v153 = vunpack.c.h.b16 %v57
  %v154 = vunpack.c.l.b16 %v58
  %v155 = vunpack.c.h.b16 %v58
  %v156 = vunpack.c.l.b16 %v59
  %v157 = vunpack.c.h.b16 %v59
  %v158 = vunpack.c.l.b16 %v60
  %v159 = vunpack.c.h.b16 %v60
  %v160 = vunpack.c.l.b16 %v61
  %v161 = vunpack.c.h.b16 %v61
  %v162 = vunpack.c.l.b16 %v62
  %v163 = vunpack.c.h.b16 %v62
  %v164 = vunpack.c.l.b16 %v63
  %v165 = vunpack.c.h.b16 %v63
  %v166 = vunpack.c.l.b16 %v64
  %v167 = vunpack.c.h.b16 %v64
  %v168 = vunpack.c.l.b16 %v65
  %v169 = vunpack.c.h.b16 %v65
  %v170 = vunpack.c.l.b16 %v66
  %v171 = vunpack.c.h.b16 %v66
  %v172 = vunpack.c.l.b16 %v67
  %v173 = vunpack.c.h.b16 %v67
  %v174 = vpack.c.b16 %v114, %v110
  %v175 = vpack.c.b16 %v115, %v111
  %v176 = vpack.c.b16 %v116, %v112
  %v177 = vpack.c.b16 %v117, %v113
  %v178 = vpack.c.b16 %v122, %v118
  %v179 = vpack.c.b16 %v123, %v119
  %v180 = vpack.c.b16 %v124, %v120
  %v181 = vpack.c.b16 %v125, %v121
  %v182 = vpack.c.b16 %v130, %v126
  %v183 = vpack.c.b16 %v131, %v127
  %v184 = vpack.c.b16 %v132, %v128
  %v185 = vpack.c.b16 %v133, %v129
  %v186 = vpack.c.b16 %v138, %v134
  %v187 = vpack.c.b16 %v139, %v135
  %v188 = vpack.c.b16 %v140, %v136
  %v189 = vpack.c.b16 %v141, %v137
  %v190 = vpack.c.b16 %v146, %v142
  %v191 = vpack.c.b16 %v147, %v143
  %v192 = vpack.c.b16 %v148, %v144
  %v193 = vpack.c.b16 %v149, %v145
  %v194 = vpack.c.b16 %v154, %v150
  %v195 = vpack.c.b16 %v155, %v151
  %v196 = vpack.c.b16 %v156, %v152
  %v197 = vpack.c.b16 %v157, %v153
  %v198 = vpack.c.b16 %v162, %v158
  %v199 = vpack.c.b16 %v163, %v159
  %v200 = vpack.c.b16 %v164, %v160
  %v201 = vpack.c.b16 %v165, %v161
  %v202 = vpack.c.b16 %v170, %v166
  %v203 = vpack.c.b16 %v171, %v167
  %v204 = vpack.c.b16 %v172, %v168
  %v205 = vpack.c.b16 %v173, %v169
  %238 = vmatpush.bf16.msra.mxu0 %v202
  %239 = vmatpush.bf16.msra.mxu0 %v198
  %240 = vmatpush.bf16.msra.mxu0 %v194
  %241 = vmatpush.bf16.msra.mxu0 %v190
  %242 = vmatpush.bf16.msra.mxu0 %v186
  %243 = vmatpush.bf16.msra.mxu0 %v182
  %244 = vmatpush.bf16.msra.mxu0 %v178
  %245 = vmatpush.bf16.msra.mxu0 %v174
  %246 = vmatmul.bf16.gmra.mxu0 0
  %v247 = vpop.f32.mrf.mxu0
  %v248 = vadd.f32 0.0, %v247
  %v249 = vpop.f32.mrf.mxu0
  %250 = vdwg.mxu0
  %251 = vmatpush.bf16.msra.mxu0 %v203
  %252 = vmatpush.bf16.msra.mxu0 %v199
  %253 = vmatpush.bf16.msra.mxu0 %v195
  %254 = vmatpush.bf16.msra.mxu0 %v191
  %255 = vmatpush.bf16.msra.mxu0 %v187
  %256 = vmatpush.bf16.msra.mxu0 %v183
  %257 = vmatpush.bf16.msra.mxu0 %v179
  %258 = vmatpush.bf16.msra.mxu0 %v175
  %259 = vmatmul.bf16.gmra.mxu0 0
  %v260 = vpop.f32.mrf.mxu0
  %v261 = vadd.f32 0.0, %v260
  %v262 = vpop.f32.mrf.mxu0
  %263 = vdwg.mxu0
  %264 = vmatpush.bf16.msra.mxu0 %v204
  %265 = vmatpush.bf16.msra.mxu0 %v200
  %266 = vmatpush.bf16.msra.mxu0 %v196
  %267 = vmatpush.bf16.msra.mxu0 %v192
  %268 = vmatpush.bf16.msra.mxu0 %v188
  %269 = vmatpush.bf16.msra.mxu0 %v184
  %270 = vmatpush.bf16.msra.mxu0 %v180
  %271 = vmatpush.bf16.msra.mxu0 %v176
  %272 = vmatmul.bf16.gmra.mxu0 0
  %v273 = vpop.f32.mrf.mxu0
  %v274 = vadd.f32 0.0, %v273
  %v275 = vpop.f32.mrf.mxu0
  %276 = vdwg.mxu0
  %277 = vmatpush.bf16.msra.mxu0 %v205
  %278 = vmatpush.bf16.msra.mxu0 %v201
  %279 = vmatpush.bf16.msra.mxu0 %v197
  %280 = vmatpush.bf16.msra.mxu0 %v193
  %281 = vmatpush.bf16.msra.mxu0 %v189
  %282 = vmatpush.bf16.msra.mxu0 %v185
  %283 = vmatpush.bf16.msra.mxu0 %v181
  %284 = vmatpush.bf16.msra.mxu0 %v177
  %285 = vmatmul.bf16.gmra.mxu0 0
  %v286 = vpop.f32.mrf.mxu0
  %v287 = vadd.f32 0.0, %v286
  %v288 = vpop.f32.mrf.mxu0
  %289 = vdwg.mxu0
  %v298 = vunpack.c.l.b16 %v24
  %v299 = vunpack.c.l.b16 %v25
  %v300 = vunpack.c.l.b16 %v26
  %v301 = vunpack.c.l.b16 %v27
  %v302 = vunpack.c.l.b16 %v28
  %v303 = vunpack.c.l.b16 %v29
  %v304 = vunpack.c.l.b16 %v30
  %v305 = vunpack.c.l.b16 %v31
  %v306 = vpack.c.b16 %v298, %v298
  %v307 = vpack.c.b16 %v299, %v299
  %v308 = vpack.c.b16 %v300, %v300
  %v309 = vpack.c.b16 %v301, %v301
  %v310 = vpack.c.b16 %v302, %v302
  %v311 = vpack.c.b16 %v303, %v303
  %v312 = vpack.c.b16 %v304, %v304
  %v313 = vpack.c.b16 %v305, %v305
  %v314 = vunpack.c.l.b16 %v306
  %v315 = vunpack.c.l.b16 %v307
  %v316 = vunpack.c.l.b16 %v308
  %v317 = vunpack.c.l.b16 %v309
  %v318 = vunpack.c.l.b16 %v310
  %v319 = vunpack.c.l.b16 %v311
  %v320 = vunpack.c.l.b16 %v312
  %v321 = vunpack.c.l.b16 %v313
  %v322 = vrot.slane %v315, 7
  %vm323 = vcmask 1041409
  %v324 = vsel %vm323, %v322, %v314
  %v325 = vrot.slane %v316, 6
  %vm326 = vcmask 1042434
  %v327 = vsel %vm326, %v325, %v324
  %v328 = vrot.slane %v317, 5
  %vm329 = vcmask 1043459
  %v330 = vsel %vm329, %v328, %v327
  %v331 = vrot.slane %v318, 4
  %vm332 = vcmask 1044484
  %v333 = vsel %vm332, %v331, %v330
  %v334 = vrot.slane %v319, 3
  %vm335 = vcmask 1045509
  %v336 = vsel %vm335, %v334, %v333
  %v337 = vrot.slane %v320, 2
  %vm338 = vcmask 1046534
  %v339 = vsel %vm338, %v337, %v336
  %v340 = vrot.slane %v321, 1
  %vm341 = vcmask 1047559
  %v342 = vsel %vm341, %v340, %v339
  %v343 = vpack.c.b16 %v342, %v342
  %v348 = vunpack.c.l.b16 %v32
  %v349 = vunpack.c.h.b16 %v32
  %v350 = vunpack.c.l.b16 %v33
  %v351 = vunpack.c.h.b16 %v33
  %v352 = vunpack.c.l.b16 %v34
  %v353 = vunpack.c.h.b16 %v34
  %v354 = vunpack.c.l.b16 %v35
  %v355 = vunpack.c.h.b16 %v35
  %v356 = vpack.c.b16 %v352, %v348
  %v357 = vpack.c.b16 %v353, %v349
  %v358 = vpack.c.b16 %v354, %v350
  %v359 = vpack.c.b16 %v355, %v351
  %vm364 = vcmask 130048
  %v366 = vsel %vm364, %v343, 0
  %368 = vmatpush.bf16.msra.mxu0 0
  %369 = vmatpush.bf16.msra.mxu0 0
  %370 = vmatpush.bf16.msra.mxu0 0
  %371 = vmatpush.bf16.msra.mxu0 0
  %372 = vmatpush.bf16.msra.mxu0 0
  %373 = vmatpush.bf16.msra.mxu0 0
  %374 = vmatpush.bf16.msra.mxu0 0
  %375 = vmatpush.bf16.msra.mxu0 %v356
  %376 = vmatmul.bf16.gmra.mxu0 %v366
  %v377 = vpop.f32.mrf.mxu0
  %v378 = vadd.f32 %v248, %v377
  %v379 = vpop.f32.mrf.mxu0
  %380 = vdwg.mxu0
  %381 = vmatpush.bf16.msra.mxu0 0
  %382 = vmatpush.bf16.msra.mxu0 0
  %383 = vmatpush.bf16.msra.mxu0 0
  %384 = vmatpush.bf16.msra.mxu0 0
  %385 = vmatpush.bf16.msra.mxu0 0
  %386 = vmatpush.bf16.msra.mxu0 0
  %387 = vmatpush.bf16.msra.mxu0 0
  %388 = vmatpush.bf16.msra.mxu0 %v357
  %389 = vmatmul.bf16.gmra.mxu0 %v366
  %v390 = vpop.f32.mrf.mxu0
  %v391 = vadd.f32 %v261, %v390
  %v392 = vpop.f32.mrf.mxu0
  %393 = vdwg.mxu0
  %394 = vmatpush.bf16.msra.mxu0 0
  %395 = vmatpush.bf16.msra.mxu0 0
  %396 = vmatpush.bf16.msra.mxu0 0
  %397 = vmatpush.bf16.msra.mxu0 0
  %398 = vmatpush.bf16.msra.mxu0 0
  %399 = vmatpush.bf16.msra.mxu0 0
  %400 = vmatpush.bf16.msra.mxu0 0
  %401 = vmatpush.bf16.msra.mxu0 %v358
  %402 = vmatmul.bf16.gmra.mxu0 %v366
  %v403 = vpop.f32.mrf.mxu0
  %v404 = vadd.f32 %v274, %v403
  %v405 = vpop.f32.mrf.mxu0
  %406 = vdwg.mxu0
  %407 = vmatpush.bf16.msra.mxu0 0
  %408 = vmatpush.bf16.msra.mxu0 0
  %409 = vmatpush.bf16.msra.mxu0 0
  %410 = vmatpush.bf16.msra.mxu0 0
  %411 = vmatpush.bf16.msra.mxu0 0
  %412 = vmatpush.bf16.msra.mxu0 0
  %413 = vmatpush.bf16.msra.mxu0 0
  %414 = vmatpush.bf16.msra.mxu0 %v359
  %415 = vmatmul.bf16.gmra.mxu0 %v366
  %v416 = vpop.f32.mrf.mxu0
  %v417 = vadd.f32 %v287, %v416
  %v418 = vpop.f32.mrf.mxu0
  %419 = vdwg.mxu0
  %v420 = vadd.f32 %v378, %v70
  %v421 = vadd.f32 %v391, %v71
  %v422 = vadd.f32 %v404, %v72
  %v423 = vadd.f32 %v417, %v73
  %v424 = vxor.u32 %v420, 2147483648
  %v425 = vmul.f32 %v424, 1.442695
  %v426 = vpow.pop %v425
  %v427 = vadd.f32 %v426, 1.0
  %v428 = vrcp.pop %v427
  %v429 = vmul.f32 %v427, %v428
  %v430 = vsub.f32 1.0, %v429
  %v431 = vmul.f32 %v428, %v430
  %v432 = vadd.f32 %v428, %v431
  %vm433 = vweird.f32 %v427
  %vm434 = vweird.f32 %v428
  %vm435 = vmor %vm433, %vm434
  %v436 = vsel %vm435, %v428, %v432
  %v437 = vand.u32 2147483647, %v427
  %vm438 = vcmp.eq.f32.partialorder %v437, 8.507059e+37
  %v439 = vand.u32 %v427, 2147483648
  %v440 = vor.u32 1.1754944e-38, %v439
  %v441 = vsel %vm438, %v440, %v436
  %v442 = vmul.f32 1.0, %v441
  %v443 = vxor.u32 %v421, 2147483648
  %v444 = vmul.f32 %v443, 1.442695
  %v445 = vpow.pop %v444
  %v446 = vadd.f32 %v445, 1.0
  %v447 = vrcp.pop %v446
  %v448 = vmul.f32 %v446, %v447
  %v449 = vsub.f32 1.0, %v448
  %v450 = vmul.f32 %v447, %v449
  %v451 = vadd.f32 %v447, %v450
  %vm452 = vweird.f32 %v446
  %vm453 = vweird.f32 %v447
  %vm454 = vmor %vm452, %vm453
  %v455 = vsel %vm454, %v447, %v451
  %v456 = vand.u32 2147483647, %v446
  %vm457 = vcmp.eq.f32.partialorder %v456, 8.507059e+37
  %v458 = vand.u32 %v446, 2147483648
  %v459 = vor.u32 1.1754944e-38, %v458
  %v460 = vsel %vm457, %v459, %v455
  %v461 = vmul.f32 1.0, %v460
  %v462 = vtanh.pop %v422
  %v463 = vxor.u32 %v423, 2147483648
  %v464 = vmul.f32 %v463, 1.442695
  %v465 = vpow.pop %v464
  %v466 = vadd.f32 %v465, 1.0
  %v467 = vrcp.pop %v466
  %v468 = vmul.f32 %v466, %v467
  %v469 = vsub.f32 1.0, %v468
  %v470 = vmul.f32 %v467, %v469
  %v471 = vadd.f32 %v467, %v470
  %vm472 = vweird.f32 %v466
  %vm473 = vweird.f32 %v467
  %vm474 = vmor %vm472, %vm473
  %v475 = vsel %vm474, %v467, %v471
  %v476 = vand.u32 2147483647, %v466
  %vm477 = vcmp.eq.f32.partialorder %v476, 8.507059e+37
  %v478 = vand.u32 %v466, 2147483648
  %v479 = vor.u32 1.1754944e-38, %v478
  %v480 = vsel %vm477, %v479, %v475
  %v481 = vmul.f32 1.0, %v480
  %v482 = vmul.f32 %v461, 0.0
  %v483 = vmul.f32 %v442, %v462
  %v484 = vadd.f32 %v482, %v483
  %v485 = vtanh.pop %v484
  %v486 = vmul.f32 %v481, %v485
  %v487 = vpack.c.bf16 %v486, %v486
  %488 = vmatpush.bf16.msra.mxu0 %v202
  %489 = vmatpush.bf16.msra.mxu0 %v198
  %490 = vmatpush.bf16.msra.mxu0 %v194
  %491 = vmatpush.bf16.msra.mxu0 %v190
  %492 = vmatpush.bf16.msra.mxu0 %v186
  %493 = vmatpush.bf16.msra.mxu0 %v182
  %494 = vmatpush.bf16.msra.mxu0 %v178
  %495 = vmatpush.bf16.msra.mxu0 %v174
  %496 = vmatmul.bf16.gmra.mxu0 %v487
  %v497 = vpop.f32.mrf.mxu0
  %v498 = vadd.f32 0.0, %v497
  %v499 = vpop.f32.mrf.mxu0
  %500 = vdwg.mxu0
  %501 = vmatpush.bf16.msra.mxu0 %v203
  %502 = vmatpush.bf16.msra.mxu0 %v199
  %503 = vmatpush.bf16.msra.mxu0 %v195
  %504 = vmatpush.bf16.msra.mxu0 %v191
  %505 = vmatpush.bf16.msra.mxu0 %v187
  %506 = vmatpush.bf16.msra.mxu0 %v183
  %507 = vmatpush.bf16.msra.mxu0 %v179
  %508 = vmatpush.bf16.msra.mxu0 %v175
  %509 = vmatmul.bf16.gmra.mxu0 %v487
  %v510 = vpop.f32.mrf.mxu0
  %v511 = vadd.f32 0.0, %v510
  %v512 = vpop.f32.mrf.mxu0
  %513 = vdwg.mxu0
  %514 = vmatpush.bf16.msra.mxu0 %v204
  %515 = vmatpush.bf16.msra.mxu0 %v200
  %516 = vmatpush.bf16.msra.mxu0 %v196
  %517 = vmatpush.bf16.msra.mxu0 %v192
  %518 = vmatpush.bf16.msra.mxu0 %v188
  %519 = vmatpush.bf16.msra.mxu0 %v184
  %520 = vmatpush.bf16.msra.mxu0 %v180
  %521 = vmatpush.bf16.msra.mxu0 %v176
  %522 = vmatmul.bf16.gmra.mxu0 %v487
  %v523 = vpop.f32.mrf.mxu0
  %v524 = vadd.f32 0.0, %v523
  %v525 = vpop.f32.mrf.mxu0
  %526 = vdwg.mxu0
  %527 = vmatpush.bf16.msra.mxu0 %v205
  %528 = vmatpush.bf16.msra.mxu0 %v201
  %529 = vmatpush.bf16.msra.mxu0 %v197
  %530 = vmatpush.bf16.msra.mxu0 %v193
  %531 = vmatpush.bf16.msra.mxu0 %v189
  %532 = vmatpush.bf16.msra.mxu0 %v185
  %533 = vmatpush.bf16.msra.mxu0 %v181
  %534 = vmatpush.bf16.msra.mxu0 %v177
  %535 = vmatmul.bf16.gmra.mxu0 %v487
  %v536 = vpop.f32.mrf.mxu0
  %v537 = vadd.f32 0.0, %v536
  %v538 = vpop.f32.mrf.mxu0
  %539 = vdwg.mxu0
  %v540 = vrot.slane %v314, 1
  %v541 = vsel %vm323, %v315, %v540
  %v542 = vrot.slane %v316, 7
  %v543 = vsel %vm326, %v542, %v541
  %v544 = vrot.slane %v317, 6
  %v545 = vsel %vm329, %v544, %v543
  %v546 = vrot.slane %v318, 5
  %v547 = vsel %vm332, %v546, %v545
  %v548 = vrot.slane %v319, 4
  %v549 = vsel %vm335, %v548, %v547
  %v550 = vrot.slane %v320, 3
  %v551 = vsel %vm338, %v550, %v549
  %v552 = vrot.slane %v321, 2
  %v553 = vsel %vm341, %v552, %v551
  %v554 = vpack.c.b16 %v553, %v553
  %v556 = vsel %vm364, %v554, 0
  %558 = vmatpush.bf16.msra.mxu0 0
  %559 = vmatpush.bf16.msra.mxu0 0
  %560 = vmatpush.bf16.msra.mxu0 0
  %561 = vmatpush.bf16.msra.mxu0 0
  %562 = vmatpush.bf16.msra.mxu0 0
  %563 = vmatpush.bf16.msra.mxu0 0
  %564 = vmatpush.bf16.msra.mxu0 0
  %565 = vmatpush.bf16.msra.mxu0 %v356
  %566 = vmatmul.bf16.gmra.mxu0 %v556
  %v567 = vpop.f32.mrf.mxu0
  %v568 = vadd.f32 %v498, %v567
  %v569 = vpop.f32.mrf.mxu0
  %570 = vdwg.mxu0
  %571 = vmatpush.bf16.msra.mxu0 0
  %572 = vmatpush.bf16.msra.mxu0 0
  %573 = vmatpush.bf16.msra.mxu0 0
  %574 = vmatpush.bf16.msra.mxu0 0
  %575 = vmatpush.bf16.msra.mxu0 0
  %576 = vmatpush.bf16.msra.mxu0 0
  %577 = vmatpush.bf16.msra.mxu0 0
  %578 = vmatpush.bf16.msra.mxu0 %v357
  %579 = vmatmul.bf16.gmra.mxu0 %v556
  %v580 = vpop.f32.mrf.mxu0
  %v581 = vadd.f32 %v511, %v580
  %v582 = vpop.f32.mrf.mxu0
  %583 = vdwg.mxu0
  %584 = vmatpush.bf16.msra.mxu0 0
  %585 = vmatpush.bf16.msra.mxu0 0
  %586 = vmatpush.bf16.msra.mxu0 0
  %587 = vmatpush.bf16.msra.mxu0 0
  %588 = vmatpush.bf16.msra.mxu0 0
  %589 = vmatpush.bf16.msra.mxu0 0
  %590 = vmatpush.bf16.msra.mxu0 0
  %591 = vmatpush.bf16.msra.mxu0 %v358
  %592 = vmatmul.bf16.gmra.mxu0 %v556
  %v593 = vpop.f32.mrf.mxu0
  %v594 = vadd.f32 %v524, %v593
  %v595 = vpop.f32.mrf.mxu0
  %596 = vdwg.mxu0
  %597 = vmatpush.bf16.msra.mxu0 0
  %598 = vmatpush.bf16.msra.mxu0 0
  %599 = vmatpush.bf16.msra.mxu0 0
  %600 = vmatpush.bf16.msra.mxu0 0
  %601 = vmatpush.bf16.msra.mxu0 0
  %602 = vmatpush.bf16.msra.mxu0 0
  %603 = vmatpush.bf16.msra.mxu0 0
  %604 = vmatpush.bf16.msra.mxu0 %v359
  %605 = vmatmul.bf16.gmra.mxu0 %v556
  %v606 = vpop.f32.mrf.mxu0
  %v607 = vadd.f32 %v537, %v606
  %v608 = vpop.f32.mrf.mxu0
  %609 = vdwg.mxu0
  %v610 = vadd.f32 %v568, %v70
  %v611 = vadd.f32 %v581, %v71
  %v612 = vadd.f32 %v594, %v72
  %v613 = vadd.f32 %v607, %v73
  %v614 = vxor.u32 %v610, 2147483648
  %v615 = vmul.f32 %v614, 1.442695
  %v616 = vpow.pop %v615
  %v617 = vadd.f32 %v616, 1.0
  %v618 = vrcp.pop %v617
  %v619 = vmul.f32 %v617, %v618
  %v620 = vsub.f32 1.0, %v619
  %v621 = vmul.f32 %v618, %v620
  %v622 = vadd.f32 %v618, %v621
  %vm623 = vweird.f32 %v617
  %vm624 = vweird.f32 %v618
  %vm625 = vmor %vm623, %vm624
  %v626 = vsel %vm625, %v618, %v622
  %v627 = vand.u32 2147483647, %v617
  %vm628 = vcmp.eq.f32.partialorder %v627, 8.507059e+37
  %v629 = vand.u32 %v617, 2147483648
  %v630 = vor.u32 1.1754944e-38, %v629
  %v631 = vsel %vm628, %v630, %v626
  %v632 = vmul.f32 1.0, %v631
  %v633 = vxor.u32 %v611, 2147483648
  %v634 = vmul.f32 %v633, 1.442695
  %v635 = vpow.pop %v634
  %v636 = vadd.f32 %v635, 1.0
  %v637 = vrcp.pop %v636
  %v638 = vmul.f32 %v636, %v637
  %v639 = vsub.f32 1.0, %v638
  %v640 = vmul.f32 %v637, %v639
  %v641 = vadd.f32 %v637, %v640
  %vm642 = vweird.f32 %v636
  %vm643 = vweird.f32 %v637
  %vm644 = vmor %vm642, %vm643
  %v645 = vsel %vm644, %v637, %v641
  %v646 = vand.u32 2147483647, %v636
  %vm647 = vcmp.eq.f32.partialorder %v646, 8.507059e+37
  %v648 = vand.u32 %v636, 2147483648
  %v649 = vor.u32 1.1754944e-38, %v648
  %v650 = vsel %vm647, %v649, %v645
  %v651 = vmul.f32 1.0, %v650
  %v652 = vtanh.pop %v612
  %v653 = vxor.u32 %v613, 2147483648
  %v654 = vmul.f32 %v653, 1.442695
  %v655 = vpow.pop %v654
  %v656 = vadd.f32 %v655, 1.0
  %v657 = vrcp.pop %v656
  %v658 = vmul.f32 %v656, %v657
  %v659 = vsub.f32 1.0, %v658
  %v660 = vmul.f32 %v657, %v659
  %v661 = vadd.f32 %v657, %v660
  %vm662 = vweird.f32 %v656
  %vm663 = vweird.f32 %v657
  %vm664 = vmor %vm662, %vm663
  %v665 = vsel %vm664, %v657, %v661
  %v666 = vand.u32 2147483647, %v656
  %vm667 = vcmp.eq.f32.partialorder %v666, 8.507059e+37
  %v668 = vand.u32 %v656, 2147483648
  %v669 = vor.u32 1.1754944e-38, %v668
  %v670 = vsel %vm667, %v669, %v665
  %v671 = vmul.f32 1.0, %v670
  %v672 = vmul.f32 %v651, %v484
  %v673 = vmul.f32 %v632, %v652
  %v674 = vadd.f32 %v672, %v673
  %v675 = vtanh.pop %v674
  %v676 = vmul.f32 %v671, %v675
  %v677 = vpack.c.bf16 %v676, %v676
  %678 = vmatpush.bf16.msra.mxu0 %v202
  %679 = vmatpush.bf16.msra.mxu0 %v198
  %680 = vmatpush.bf16.msra.mxu0 %v194
  %681 = vmatpush.bf16.msra.mxu0 %v190
  %682 = vmatpush.bf16.msra.mxu0 %v186
  %683 = vmatpush.bf16.msra.mxu0 %v182
  %684 = vmatpush.bf16.msra.mxu0 %v178
  %685 = vmatpush.bf16.msra.mxu0 %v174
  %686 = vmatmul.bf16.gmra.mxu0 %v677
  %v687 = vpop.f32.mrf.mxu0
  %v688 = vadd.f32 0.0, %v687
  %v689 = vpop.f32.mrf.mxu0
  %690 = vdwg.mxu0
  %691 = vmatpush.bf16.msra.mxu0 %v203
  %692 = vmatpush.bf16.msra.mxu0 %v199
  %693 = vmatpush.bf16.msra.mxu0 %v195
  %694 = vmatpush.bf16.msra.mxu0 %v191
  %695 = vmatpush.bf16.msra.mxu0 %v187
  %696 = vmatpush.bf16.msra.mxu0 %v183
  %697 = vmatpush.bf16.msra.mxu0 %v179
  %698 = vmatpush.bf16.msra.mxu0 %v175
  %699 = vmatmul.bf16.gmra.mxu0 %v677
  %v700 = vpop.f32.mrf.mxu0
  %v701 = vadd.f32 0.0, %v700
  %v702 = vpop.f32.mrf.mxu0
  %703 = vdwg.mxu0
  %704 = vmatpush.bf16.msra.mxu0 %v204
  %705 = vmatpush.bf16.msra.mxu0 %v200
  %706 = vmatpush.bf16.msra.mxu0 %v196
  %707 = vmatpush.bf16.msra.mxu0 %v192
  %708 = vmatpush.bf16.msra.mxu0 %v188
  %709 = vmatpush.bf16.msra.mxu0 %v184
  %710 = vmatpush.bf16.msra.mxu0 %v180
  %711 = vmatpush.bf16.msra.mxu0 %v176
  %712 = vmatmul.bf16.gmra.mxu0 %v677
  %v713 = vpop.f32.mrf.mxu0
  %v714 = vadd.f32 0.0, %v713
  %v715 = vpop.f32.mrf.mxu0
  %716 = vdwg.mxu0
  %717 = vmatpush.bf16.msra.mxu0 %v205
  %718 = vmatpush.bf16.msra.mxu0 %v201
  %719 = vmatpush.bf16.msra.mxu0 %v197
  %720 = vmatpush.bf16.msra.mxu0 %v193
  %721 = vmatpush.bf16.msra.mxu0 %v189
  %722 = vmatpush.bf16.msra.mxu0 %v185
  %723 = vmatpush.bf16.msra.mxu0 %v181
  %724 = vmatpush.bf16.msra.mxu0 %v177
  %725 = vmatmul.bf16.gmra.mxu0 %v677
  %v726 = vpop.f32.mrf.mxu0
  %v727 = vadd.f32 0.0, %v726
  %v728 = vpop.f32.mrf.mxu0
  %729 = vdwg.mxu0
  %v730 = vrot.slane %v314, 2
  %v731 = vrot.slane %v315, 1
  %v732 = vsel %vm323, %v731, %v730
  %v733 = vsel %vm326, %v316, %v732
  %v734 = vrot.slane %v317, 7
  %v735 = vsel %vm329, %v734, %v733
  %v736 = vrot.slane %v318, 6
  %v737 = vsel %vm332, %v736, %v735
  %v738 = vrot.slane %v319, 5
  %v739 = vsel %vm335, %v738, %v737
  %v740 = vrot.slane %v320, 4
  %v741 = vsel %vm338, %v740, %v739
  %v742 = vrot.slane %v321, 3
  %v743 = vsel %vm341, %v742, %v741
  %v744 = vpack.c.b16 %v743, %v743
  %v746 = vsel %vm364, %v744, 0
  %748 = vmatpush.bf16.msra.mxu0 0
  %749 = vmatpush.bf16.msra.mxu0 0
  %750 = vmatpush.bf16.msra.mxu0 0
  %751 = vmatpush.bf16.msra.mxu0 0
  %752 = vmatpush.bf16.msra.mxu0 0
  %753 = vmatpush.bf16.msra.mxu0 0
  %754 = vmatpush.bf16.msra.mxu0 0
  %755 = vmatpush.bf16.msra.mxu0 %v356
  %756 = vmatmul.bf16.gmra.mxu0 %v746
  %v757 = vpop.f32.mrf.mxu0
  %v758 = vadd.f32 %v688, %v757
  %v759 = vpop.f32.mrf.mxu0
  %760 = vdwg.mxu0
  %761 = vmatpush.bf16.msra.mxu0 0
  %762 = vmatpush.bf16.msra.mxu0 0
  %763 = vmatpush.bf16.msra.mxu0 0
  %764 = vmatpush.bf16.msra.mxu0 0
  %765 = vmatpush.bf16.msra.mxu0 0
  %766 = vmatpush.bf16.msra.mxu0 0
  %767 = vmatpush.bf16.msra.mxu0 0
  %768 = vmatpush.bf16.msra.mxu0 %v357
  %769 = vmatmul.bf16.gmra.mxu0 %v746
  %v770 = vpop.f32.mrf.mxu0
  %v771 = vadd.f32 %v701, %v770
  %v772 = vpop.f32.mrf.mxu0
  %773 = vdwg.mxu0
  %774 = vmatpush.bf16.msra.mxu0 0
  %775 = vmatpush.bf16.msra.mxu0 0
  %776 = vmatpush.bf16.msra.mxu0 0
  %777 = vmatpush.bf16.msra.mxu0 0
  %778 = vmatpush.bf16.msra.mxu0 0
  %779 = vmatpush.bf16.msra.mxu0 0
  %780 = vmatpush.bf16.msra.mxu0 0
  %781 = vmatpush.bf16.msra.mxu0 %v358
  %782 = vmatmul.bf16.gmra.mxu0 %v746
  %v783 = vpop.f32.mrf.mxu0
  %v784 = vadd.f32 %v714, %v783
  %v785 = vpop.f32.mrf.mxu0
  %786 = vdwg.mxu0
  %787 = vmatpush.bf16.msra.mxu0 0
  %788 = vmatpush.bf16.msra.mxu0 0
  %789 = vmatpush.bf16.msra.mxu0 0
  %790 = vmatpush.bf16.msra.mxu0 0
  %791 = vmatpush.bf16.msra.mxu0 0
  %792 = vmatpush.bf16.msra.mxu0 0
  %793 = vmatpush.bf16.msra.mxu0 0
  %794 = vmatpush.bf16.msra.mxu0 %v359
  %795 = vmatmul.bf16.gmra.mxu0 %v746
  %v796 = vpop.f32.mrf.mxu0
  %v797 = vadd.f32 %v727, %v796
  %v798 = vpop.f32.mrf.mxu0
  %799 = vdwg.mxu0
  %v800 = vadd.f32 %v758, %v70
  %v801 = vadd.f32 %v771, %v71
  %v802 = vadd.f32 %v784, %v72
  %v803 = vadd.f32 %v797, %v73
  %v804 = vxor.u32 %v800, 2147483648
  %v805 = vmul.f32 %v804, 1.442695
  %v806 = vpow.pop %v805
  %v807 = vadd.f32 %v806, 1.0
  %v808 = vrcp.pop %v807
  %v809 = vmul.f32 %v807, %v808
  %v810 = vsub.f32 1.0, %v809
  %v811 = vmul.f32 %v808, %v810
  %v812 = vadd.f32 %v808, %v811
  %vm813 = vweird.f32 %v807
  %vm814 = vweird.f32 %v808
  %vm815 = vmor %vm813, %vm814
  %v816 = vsel %vm815, %v808, %v812
  %v817 = vand.u32 2147483647, %v807
  %vm818 = vcmp.eq.f32.partialorder %v817, 8.507059e+37
  %v819 = vand.u32 %v807, 2147483648
  %v820 = vor.u32 1.1754944e-38, %v819
  %v821 = vsel %vm818, %v820, %v816
  %v822 = vmul.f32 1.0, %v821
  %v823 = vxor.u32 %v801, 2147483648
  %v824 = vmul.f32 %v823, 1.442695
  %v825 = vpow.pop %v824
  %v826 = vadd.f32 %v825, 1.0
  %v827 = vrcp.pop %v826
  %v828 = vmul.f32 %v826, %v827
  %v829 = vsub.f32 1.0, %v828
  %v830 = vmul.f32 %v827, %v829
  %v831 = vadd.f32 %v827, %v830
  %vm832 = vweird.f32 %v826
  %vm833 = vweird.f32 %v827
  %vm834 = vmor %vm832, %vm833
  %v835 = vsel %vm834, %v827, %v831
  %v836 = vand.u32 2147483647, %v826
  %vm837 = vcmp.eq.f32.partialorder %v836, 8.507059e+37
  %v838 = vand.u32 %v826, 2147483648
  %v839 = vor.u32 1.1754944e-38, %v838
  %v840 = vsel %vm837, %v839, %v835
  %v841 = vmul.f32 1.0, %v840
  %v842 = vtanh.pop %v802
  %v843 = vxor.u32 %v803, 2147483648
  %v844 = vmul.f32 %v843, 1.442695
  %v845 = vpow.pop %v844
  %v846 = vadd.f32 %v845, 1.0
  %v847 = vrcp.pop %v846
  %v848 = vmul.f32 %v846, %v847
  %v849 = vsub.f32 1.0, %v848
  %v850 = vmul.f32 %v847, %v849
  %v851 = vadd.f32 %v847, %v850
  %vm852 = vweird.f32 %v846
  %vm853 = vweird.f32 %v847
  %vm854 = vmor %vm852, %vm853
  %v855 = vsel %vm854, %v847, %v851
  %v856 = vand.u32 2147483647, %v846
  %vm857 = vcmp.eq.f32.partialorder %v856, 8.507059e+37
  %v858 = vand.u32 %v846, 2147483648
  %v859 = vor.u32 1.1754944e-38, %v858
  %v860 = vsel %vm857, %v859, %v855
  %v861 = vmul.f32 1.0, %v860
  %v862 = vmul.f32 %v841, %v674
  %v863 = vmul.f32 %v822, %v842
  %v864 = vadd.f32 %v862, %v863
  %v865 = vtanh.pop %v864
  %v866 = vmul.f32 %v861, %v865
  %v867 = vpack.c.bf16 %v866, %v866
  %868 = vmatpush.bf16.msra.mxu0 %v202
  %869 = vmatpush.bf16.msra.mxu0 %v198
  %870 = vmatpush.bf16.msra.mxu0 %v194
  %871 = vmatpush.bf16.msra.mxu0 %v190
  %872 = vmatpush.bf16.msra.mxu0 %v186
  %873 = vmatpush.bf16.msra.mxu0 %v182
  %874 = vmatpush.bf16.msra.mxu0 %v178
  %875 = vmatpush.bf16.msra.mxu0 %v174
  %876 = vmatmul.bf16.gmra.mxu0 %v867
  %v877 = vpop.f32.mrf.mxu0
  %v878 = vadd.f32 0.0, %v877
  %v879 = vpop.f32.mrf.mxu0
  %880 = vdwg.mxu0
  %881 = vmatpush.bf16.msra.mxu0 %v203
  %882 = vmatpush.bf16.msra.mxu0 %v199
  %883 = vmatpush.bf16.msra.mxu0 %v195
  %884 = vmatpush.bf16.msra.mxu0 %v191
  %885 = vmatpush.bf16.msra.mxu0 %v187
  %886 = vmatpush.bf16.msra.mxu0 %v183
  %887 = vmatpush.bf16.msra.mxu0 %v179
  %888 = vmatpush.bf16.msra.mxu0 %v175
  %889 = vmatmul.bf16.gmra.mxu0 %v867
  %v890 = vpop.f32.mrf.mxu0
  %v891 = vadd.f32 0.0, %v890
  %v892 = vpop.f32.mrf.mxu0
  %893 = vdwg.mxu0
  %894 = vmatpush.bf16.msra.mxu0 %v204
  %895 = vmatpush.bf16.msra.mxu0 %v200
  %896 = vmatpush.bf16.msra.mxu0 %v196
  %897 = vmatpush.bf16.msra.mxu0 %v192
  %898 = vmatpush.bf16.msra.mxu0 %v188
  %899 = vmatpush.bf16.msra.mxu0 %v184
  %900 = vmatpush.bf16.msra.mxu0 %v180
  %901 = vmatpush.bf16.msra.mxu0 %v176
  %902 = vmatmul.bf16.gmra.mxu0 %v867
  %v903 = vpop.f32.mrf.mxu0
  %v904 = vadd.f32 0.0, %v903
  %v905 = vpop.f32.mrf.mxu0
  %906 = vdwg.mxu0
  %907 = vmatpush.bf16.msra.mxu0 %v205
  %908 = vmatpush.bf16.msra.mxu0 %v201
  %909 = vmatpush.bf16.msra.mxu0 %v197
  %910 = vmatpush.bf16.msra.mxu0 %v193
  %911 = vmatpush.bf16.msra.mxu0 %v189
  %912 = vmatpush.bf16.msra.mxu0 %v185
  %913 = vmatpush.bf16.msra.mxu0 %v181
  %914 = vmatpush.bf16.msra.mxu0 %v177
  %915 = vmatmul.bf16.gmra.mxu0 %v867
  %v916 = vpop.f32.mrf.mxu0
  %v917 = vadd.f32 0.0, %v916
  %v918 = vpop.f32.mrf.mxu0
  %919 = vdwg.mxu0
  %v920 = vrot.slane %v314, 3
  %v921 = vrot.slane %v315, 2
  %v922 = vsel %vm323, %v921, %v920
  %v923 = vrot.slane %v316, 1
  %v924 = vsel %vm326, %v923, %v922
  %v925 = vsel %vm329, %v317, %v924
  %v926 = vrot.slane %v318, 7
  %v927 = vsel %vm332, %v926, %v925
  %v928 = vrot.slane %v319, 6
  %v929 = vsel %vm335, %v928, %v927
  %v930 = vrot.slane %v320, 5
  %v931 = vsel %vm338, %v930, %v929
  %v932 = vrot.slane %v321, 4
  %v933 = vsel %vm341, %v932, %v931
  %v934 = vpack.c.b16 %v933, %v933
  %v936 = vsel %vm364, %v934, 0
  %938 = vmatpush.bf16.msra.mxu0 0
  %939 = vmatpush.bf16.msra.mxu0 0
  %940 = vmatpush.bf16.msra.mxu0 0
  %941 = vmatpush.bf16.msra.mxu0 0
  %942 = vmatpush.bf16.msra.mxu0 0
  %943 = vmatpush.bf16.msra.mxu0 0
  %944 = vmatpush.bf16.msra.mxu0 0
  %945 = vmatpush.bf16.msra.mxu0 %v356
  %946 = vmatmul.bf16.gmra.mxu0 %v936
  %v947 = vpop.f32.mrf.mxu0
  %v948 = vadd.f32 %v878, %v947
  %v949 = vpop.f32.mrf.mxu0
  %950 = vdwg.mxu0
  %951 = vmatpush.bf16.msra.mxu0 0
  %952 = vmatpush.bf16.msra.mxu0 0
  %953 = vmatpush.bf16.msra.mxu0 0
  %954 = vmatpush.bf16.msra.mxu0 0
  %955 = vmatpush.bf16.msra.mxu0 0
  %956 = vmatpush.bf16.msra.mxu0 0
  %957 = vmatpush.bf16.msra.mxu0 0
  %958 = vmatpush.bf16.msra.mxu0 %v357
  %959 = vmatmul.bf16.gmra.mxu0 %v936
  %v960 = vpop.f32.mrf.mxu0
  %v961 = vadd.f32 %v891, %v960
  %v962 = vpop.f32.mrf.mxu0
  %963 = vdwg.mxu0
  %964 = vmatpush.bf16.msra.mxu0 0
  %965 = vmatpush.bf16.msra.mxu0 0
  %966 = vmatpush.bf16.msra.mxu0 0
  %967 = vmatpush.bf16.msra.mxu0 0
  %968 = vmatpush.bf16.msra.mxu0 0
  %969 = vmatpush.bf16.msra.mxu0 0
  %970 = vmatpush.bf16.msra.mxu0 0
  %971 = vmatpush.bf16.msra.mxu0 %v358
  %972 = vmatmul.bf16.gmra.mxu0 %v936
  %v973 = vpop.f32.mrf.mxu0
  %v974 = vadd.f32 %v904, %v973
  %v975 = vpop.f32.mrf.mxu0
  %976 = vdwg.mxu0
  %977 = vmatpush.bf16.msra.mxu0 0
  %978 = vmatpush.bf16.msra.mxu0 0
  %979 = vmatpush.bf16.msra.mxu0 0
  %980 = vmatpush.bf16.msra.mxu0 0
  %981 = vmatpush.bf16.msra.mxu0 0
  %982 = vmatpush.bf16.msra.mxu0 0
  %983 = vmatpush.bf16.msra.mxu0 0
  %984 = vmatpush.bf16.msra.mxu0 %v359
  %985 = vmatmul.bf16.gmra.mxu0 %v936
  %v986 = vpop.f32.mrf.mxu0
  %v987 = vadd.f32 %v917, %v986
  %v988 = vpop.f32.mrf.mxu0
  %989 = vdwg.mxu0
  %v990 = vadd.f32 %v948, %v70
  %v991 = vadd.f32 %v961, %v71
  %v992 = vadd.f32 %v974, %v72
  %v993 = vadd.f32 %v987, %v73
  %v994 = vxor.u32 %v990, 2147483648
  %v995 = vmul.f32 %v994, 1.442695
  %v996 = vpow.pop %v995
  %v997 = vadd.f32 %v996, 1.0
  %v998 = vrcp.pop %v997
  %v999 = vmul.f32 %v997, %v998
  %v1000 = vsub.f32 1.0, %v999
  %v1001 = vmul.f32 %v998, %v1000
  %v1002 = vadd.f32 %v998, %v1001
  %vm1003 = vweird.f32 %v997
  %vm1004 = vweird.f32 %v998
  %vm1005 = vmor %vm1003, %vm1004
  %v1006 = vsel %vm1005, %v998, %v1002
  %v1007 = vand.u32 2147483647, %v997
  %vm1008 = vcmp.eq.f32.partialorder %v1007, 8.507059e+37
  %v1009 = vand.u32 %v997, 2147483648
  %v1010 = vor.u32 1.1754944e-38, %v1009
  %v1011 = vsel %vm1008, %v1010, %v1006
  %v1012 = vmul.f32 1.0, %v1011
  %v1013 = vxor.u32 %v991, 2147483648
  %v1014 = vmul.f32 %v1013, 1.442695
  %v1015 = vpow.pop %v1014
  %v1016 = vadd.f32 %v1015, 1.0
  %v1017 = vrcp.pop %v1016
  %v1018 = vmul.f32 %v1016, %v1017
  %v1019 = vsub.f32 1.0, %v1018
  %v1020 = vmul.f32 %v1017, %v1019
  %v1021 = vadd.f32 %v1017, %v1020
  %vm1022 = vweird.f32 %v1016
  %vm1023 = vweird.f32 %v1017
  %vm1024 = vmor %vm1022, %vm1023
  %v1025 = vsel %vm1024, %v1017, %v1021
  %v1026 = vand.u32 2147483647, %v1016
  %vm1027 = vcmp.eq.f32.partialorder %v1026, 8.507059e+37
  %v1028 = vand.u32 %v1016, 2147483648
  %v1029 = vor.u32 1.1754944e-38, %v1028
  %v1030 = vsel %vm1027, %v1029, %v1025
  %v1031 = vmul.f32 1.0, %v1030
  %v1032 = vtanh.pop %v992
  %v1033 = vxor.u32 %v993, 2147483648
  %v1034 = vmul.f32 %v1033, 1.442695
  %v1035 = vpow.pop %v1034
  %v1036 = vadd.f32 %v1035, 1.0
  %v1037 = vrcp.pop %v1036
  %v1038 = vmul.f32 %v1036, %v1037
  %v1039 = vsub.f32 1.0, %v1038
  %v1040 = vmul.f32 %v1037, %v1039
  %v1041 = vadd.f32 %v1037, %v1040
  %vm1042 = vweird.f32 %v1036
  %vm1043 = vweird.f32 %v1037
  %vm1044 = vmor %vm1042, %vm1043
  %v1045 = vsel %vm1044, %v1037, %v1041
  %v1046 = vand.u32 2147483647, %v1036
  %vm1047 = vcmp.eq.f32.partialorder %v1046, 8.507059e+37
  %v1048 = vand.u32 %v1036, 2147483648
  %v1049 = vor.u32 1.1754944e-38, %v1048
  %v1050 = vsel %vm1047, %v1049, %v1045
  %v1051 = vmul.f32 1.0, %v1050
  %v1052 = vmul.f32 %v1031, %v864
  %v1053 = vmul.f32 %v1012, %v1032
  %v1054 = vadd.f32 %v1052, %v1053
  %v1055 = vtanh.pop %v1054
  %v1056 = vmul.f32 %v1051, %v1055
  %v1057 = vpack.c.bf16 %v1056, %v1056
  %1058 = vmatpush.bf16.msra.mxu0 %v202
  %1059 = vmatpush.bf16.msra.mxu0 %v198
  %1060 = vmatpush.bf16.msra.mxu0 %v194
  %1061 = vmatpush.bf16.msra.mxu0 %v190
  %1062 = vmatpush.bf16.msra.mxu0 %v186
  %1063 = vmatpush.bf16.msra.mxu0 %v182
  %1064 = vmatpush.bf16.msra.mxu0 %v178
  %1065 = vmatpush.bf16.msra.mxu0 %v174
  %1066 = vmatmul.bf16.gmra.mxu0 %v1057
  %v1067 = vpop.f32.mrf.mxu0
  %v1068 = vadd.f32 0.0, %v1067
  %v1069 = vpop.f32.mrf.mxu0
  %1070 = vdwg.mxu0
  %1071 = vmatpush.bf16.msra.mxu0 %v203
  %1072 = vmatpush.bf16.msra.mxu0 %v199
  %1073 = vmatpush.bf16.msra.mxu0 %v195
  %1074 = vmatpush.bf16.msra.mxu0 %v191
  %1075 = vmatpush.bf16.msra.mxu0 %v187
  %1076 = vmatpush.bf16.msra.mxu0 %v183
  %1077 = vmatpush.bf16.msra.mxu0 %v179
  %1078 = vmatpush.bf16.msra.mxu0 %v175
  %1079 = vmatmul.bf16.gmra.mxu0 %v1057
  %v1080 = vpop.f32.mrf.mxu0
  %v1081 = vadd.f32 0.0, %v1080
  %v1082 = vpop.f32.mrf.mxu0
  %1083 = vdwg.mxu0
  %1084 = vmatpush.bf16.msra.mxu0 %v204
  %1085 = vmatpush.bf16.msra.mxu0 %v200
  %1086 = vmatpush.bf16.msra.mxu0 %v196
  %1087 = vmatpush.bf16.msra.mxu0 %v192
  %1088 = vmatpush.bf16.msra.mxu0 %v188
  %1089 = vmatpush.bf16.msra.mxu0 %v184
  %1090 = vmatpush.bf16.msra.mxu0 %v180
  %1091 = vmatpush.bf16.msra.mxu0 %v176
  %1092 = vmatmul.bf16.gmra.mxu0 %v1057
  %v1093 = vpop.f32.mrf.mxu0
  %v1094 = vadd.f32 0.0, %v1093
  %v1095 = vpop.f32.mrf.mxu0
  %1096 = vdwg.mxu0
  %1097 = vmatpush.bf16.msra.mxu0 %v205
  %1098 = vmatpush.bf16.msra.mxu0 %v201
  %1099 = vmatpush.bf16.msra.mxu0 %v197
  %1100 = vmatpush.bf16.msra.mxu0 %v193
  %1101 = vmatpush.bf16.msra.mxu0 %v189
  %1102 = vmatpush.bf16.msra.mxu0 %v185
  %1103 = vmatpush.bf16.msra.mxu0 %v181
  %1104 = vmatpush.bf16.msra.mxu0 %v177
  %1105 = vmatmul.bf16.gmra.mxu0 %v1057
  %v1106 = vpop.f32.mrf.mxu0
  %v1107 = vadd.f32 0.0, %v1106
  %v1108 = vpop.f32.mrf.mxu0
  %1109 = vdwg.mxu0
  %v1110 = vrot.slane %v314, 4
  %v1111 = vrot.slane %v315, 3
  %v1112 = vsel %vm323, %v1111, %v1110
  %v1113 = vrot.slane %v316, 2
  %v1114 = vsel %vm326, %v1113, %v1112
  %v1115 = vrot.slane %v317, 1
  %v1116 = vsel %vm329, %v1115, %v1114
  %v1117 = vsel %vm332, %v318, %v1116
  %v1118 = vrot.slane %v319, 7
  %v1119 = vsel %vm335, %v1118, %v1117
  %v1120 = vrot.slane %v320, 6
  %v1121 = vsel %vm338, %v1120, %v1119
  %v1122 = vrot.slane %v321, 5
  %v1123 = vsel %vm341, %v1122, %v1121
  %v1124 = vpack.c.b16 %v1123, %v1123
  %v1126 = vsel %vm364, %v1124, 0
  %1128 = vmatpush.bf16.msra.mxu0 0
  %1129 = vmatpush.bf16.msra.mxu0 0
  %1130 = vmatpush.bf16.msra.mxu0 0
  %1131 = vmatpush.bf16.msra.mxu0 0
  %1132 = vmatpush.bf16.msra.mxu0 0
  %1133 = vmatpush.bf16.msra.mxu0 0
  %1134 = vmatpush.bf16.msra.mxu0 0
  %1135 = vmatpush.bf16.msra.mxu0 %v356
  %1136 = vmatmul.bf16.gmra.mxu0 %v1126
  %v1137 = vpop.f32.mrf.mxu0
  %v1138 = vadd.f32 %v1068, %v1137
  %v1139 = vpop.f32.mrf.mxu0
  %1140 = vdwg.mxu0
  %1141 = vmatpush.bf16.msra.mxu0 0
  %1142 = vmatpush.bf16.msra.mxu0 0
  %1143 = vmatpush.bf16.msra.mxu0 0
  %1144 = vmatpush.bf16.msra.mxu0 0
  %1145 = vmatpush.bf16.msra.mxu0 0
  %1146 = vmatpush.bf16.msra.mxu0 0
  %1147 = vmatpush.bf16.msra.mxu0 0
  %1148 = vmatpush.bf16.msra.mxu0 %v357
  %1149 = vmatmul.bf16.gmra.mxu0 %v1126
  %v1150 = vpop.f32.mrf.mxu0
  %v1151 = vadd.f32 %v1081, %v1150
  %v1152 = vpop.f32.mrf.mxu0
  %1153 = vdwg.mxu0
  %1154 = vmatpush.bf16.msra.mxu0 0
  %1155 = vmatpush.bf16.msra.mxu0 0
  %1156 = vmatpush.bf16.msra.mxu0 0
  %1157 = vmatpush.bf16.msra.mxu0 0
  %1158 = vmatpush.bf16.msra.mxu0 0
  %1159 = vmatpush.bf16.msra.mxu0 0
  %1160 = vmatpush.bf16.msra.mxu0 0
  %1161 = vmatpush.bf16.msra.mxu0 %v358
  %1162 = vmatmul.bf16.gmra.mxu0 %v1126
  %v1163 = vpop.f32.mrf.mxu0
  %v1164 = vadd.f32 %v1094, %v1163
  %v1165 = vpop.f32.mrf.mxu0
  %1166 = vdwg.mxu0
  %1167 = vmatpush.bf16.msra.mxu0 0
  %1168 = vmatpush.bf16.msra.mxu0 0
  %1169 = vmatpush.bf16.msra.mxu0 0
  %1170 = vmatpush.bf16.msra.mxu0 0
  %1171 = vmatpush.bf16.msra.mxu0 0
  %1172 = vmatpush.bf16.msra.mxu0 0
  %1173 = vmatpush.bf16.msra.mxu0 0
  %1174 = vmatpush.bf16.msra.mxu0 %v359
  %1175 = vmatmul.bf16.gmra.mxu0 %v1126
  %v1176 = vpop.f32.mrf.mxu0
  %v1177 = vadd.f32 %v1107, %v1176
  %v1178 = vpop.f32.mrf.mxu0
  %1179 = vdwg.mxu0
  %v1180 = vadd.f32 %v1138, %v70
  %v1181 = vadd.f32 %v1151, %v71
  %v1182 = vadd.f32 %v1164, %v72
  %v1183 = vadd.f32 %v1177, %v73
  %v1184 = vxor.u32 %v1180, 2147483648
  %v1185 = vmul.f32 %v1184, 1.442695
  %v1186 = vpow.pop %v1185
  %v1187 = vadd.f32 %v1186, 1.0
  %v1188 = vrcp.pop %v1187
  %v1189 = vmul.f32 %v1187, %v1188
  %v1190 = vsub.f32 1.0, %v1189
  %v1191 = vmul.f32 %v1188, %v1190
  %v1192 = vadd.f32 %v1188, %v1191
  %vm1193 = vweird.f32 %v1187
  %vm1194 = vweird.f32 %v1188
  %vm1195 = vmor %vm1193, %vm1194
  %v1196 = vsel %vm1195, %v1188, %v1192
  %v1197 = vand.u32 2147483647, %v1187
  %vm1198 = vcmp.eq.f32.partialorder %v1197, 8.507059e+37
  %v1199 = vand.u32 %v1187, 2147483648
  %v1200 = vor.u32 1.1754944e-38, %v1199
  %v1201 = vsel %vm1198, %v1200, %v1196
  %v1202 = vmul.f32 1.0, %v1201
  %v1203 = vxor.u32 %v1181, 2147483648
  %v1204 = vmul.f32 %v1203, 1.442695
  %v1205 = vpow.pop %v1204
  %v1206 = vadd.f32 %v1205, 1.0
  %v1207 = vrcp.pop %v1206
  %v1208 = vmul.f32 %v1206, %v1207
  %v1209 = vsub.f32 1.0, %v1208
  %v1210 = vmul.f32 %v1207, %v1209
  %v1211 = vadd.f32 %v1207, %v1210
  %vm1212 = vweird.f32 %v1206
  %vm1213 = vweird.f32 %v1207
  %vm1214 = vmor %vm1212, %vm1213
  %v1215 = vsel %vm1214, %v1207, %v1211
  %v1216 = vand.u32 2147483647, %v1206
  %vm1217 = vcmp.eq.f32.partialorder %v1216, 8.507059e+37
  %v1218 = vand.u32 %v1206, 2147483648
  %v1219 = vor.u32 1.1754944e-38, %v1218
  %v1220 = vsel %vm1217, %v1219, %v1215
  %v1221 = vmul.f32 1.0, %v1220
  %v1222 = vtanh.pop %v1182
  %v1223 = vxor.u32 %v1183, 2147483648
  %v1224 = vmul.f32 %v1223, 1.442695
  %v1225 = vpow.pop %v1224
  %v1226 = vadd.f32 %v1225, 1.0
  %v1227 = vrcp.pop %v1226
  %v1228 = vmul.f32 %v1226, %v1227
  %v1229 = vsub.f32 1.0, %v1228
  %v1230 = vmul.f32 %v1227, %v1229
  %v1231 = vadd.f32 %v1227, %v1230
  %vm1232 = vweird.f32 %v1226
  %vm1233 = vweird.f32 %v1227
  %vm1234 = vmor %vm1232, %vm1233
  %v1235 = vsel %vm1234, %v1227, %v1231
  %v1236 = vand.u32 2147483647, %v1226
  %vm1237 = vcmp.eq.f32.partialorder %v1236, 8.507059e+37
  %v1238 = vand.u32 %v1226, 2147483648
  %v1239 = vor.u32 1.1754944e-38, %v1238
  %v1240 = vsel %vm1237, %v1239, %v1235
  %v1241 = vmul.f32 1.0, %v1240
  %v1242 = vmul.f32 %v1221, %v1054
  %v1243 = vmul.f32 %v1202, %v1222
  %v1244 = vadd.f32 %v1242, %v1243
  %v1245 = vtanh.pop %v1244
  %v1246 = vmul.f32 %v1241, %v1245
  %v1247 = vpack.c.bf16 %v1246, %v1246
  %1248 = vmatpush.bf16.msra.mxu0 %v202
  %1249 = vmatpush.bf16.msra.mxu0 %v198
  %1250 = vmatpush.bf16.msra.mxu0 %v194
  %1251 = vmatpush.bf16.msra.mxu0 %v190
  %1252 = vmatpush.bf16.msra.mxu0 %v186
  %1253 = vmatpush.bf16.msra.mxu0 %v182
  %1254 = vmatpush.bf16.msra.mxu0 %v178
  %1255 = vmatpush.bf16.msra.mxu0 %v174
  %1256 = vmatmul.bf16.gmra.mxu0 %v1247
  %v1257 = vpop.f32.mrf.mxu0
  %v1258 = vadd.f32 0.0, %v1257
  %v1259 = vpop.f32.mrf.mxu0
  %1260 = vdwg.mxu0
  %1261 = vmatpush.bf16.msra.mxu0 %v203
  %1262 = vmatpush.bf16.msra.mxu0 %v199
  %1263 = vmatpush.bf16.msra.mxu0 %v195
  %1264 = vmatpush.bf16.msra.mxu0 %v191
  %1265 = vmatpush.bf16.msra.mxu0 %v187
  %1266 = vmatpush.bf16.msra.mxu0 %v183
  %1267 = vmatpush.bf16.msra.mxu0 %v179
  %1268 = vmatpush.bf16.msra.mxu0 %v175
  %1269 = vmatmul.bf16.gmra.mxu0 %v1247
  %v1270 = vpop.f32.mrf.mxu0
  %v1271 = vadd.f32 0.0, %v1270
  %v1272 = vpop.f32.mrf.mxu0
  %1273 = vdwg.mxu0
  %1274 = vmatpush.bf16.msra.mxu0 %v204
  %1275 = vmatpush.bf16.msra.mxu0 %v200
  %1276 = vmatpush.bf16.msra.mxu0 %v196
  %1277 = vmatpush.bf16.msra.mxu0 %v192
  %1278 = vmatpush.bf16.msra.mxu0 %v188
  %1279 = vmatpush.bf16.msra.mxu0 %v184
  %1280 = vmatpush.bf16.msra.mxu0 %v180
  %1281 = vmatpush.bf16.msra.mxu0 %v176
  %1282 = vmatmul.bf16.gmra.mxu0 %v1247
  %v1283 = vpop.f32.mrf.mxu0
  %v1284 = vadd.f32 0.0, %v1283
  %v1285 = vpop.f32.mrf.mxu0
  %1286 = vdwg.mxu0
  %1287 = vmatpush.bf16.msra.mxu0 %v205
  %1288 = vmatpush.bf16.msra.mxu0 %v201
  %1289 = vmatpush.bf16.msra.mxu0 %v197
  %1290 = vmatpush.bf16.msra.mxu0 %v193
  %1291 = vmatpush.bf16.msra.mxu0 %v189
  %1292 = vmatpush.bf16.msra.mxu0 %v185
  %1293 = vmatpush.bf16.msra.mxu0 %v181
  %1294 = vmatpush.bf16.msra.mxu0 %v177
  %1295 = vmatmul.bf16.gmra.mxu0 %v1247
  %v1296 = vpop.f32.mrf.mxu0
  %v1297 = vadd.f32 0.0, %v1296
  %v1298 = vpop.f32.mrf.mxu0
  %1299 = vdwg.mxu0
  %v1300 = vrot.slane %v314, 5
  %v1301 = vrot.slane %v315, 4
  %v1302 = vsel %vm323, %v1301, %v1300
  %v1303 = vrot.slane %v316, 3
  %v1304 = vsel %vm326, %v1303, %v1302
  %v1305 = vrot.slane %v317, 2
  %v1306 = vsel %vm329, %v1305, %v1304
  %v1307 = vrot.slane %v318, 1
  %v1308 = vsel %vm332, %v1307, %v1306
  %v1309 = vsel %vm335, %v319, %v1308
  %v1310 = vrot.slane %v320, 7
  %v1311 = vsel %vm338, %v1310, %v1309
  %v1312 = vrot.slane %v321, 6
  %v1313 = vsel %vm341, %v1312, %v1311
  %v1314 = vpack.c.b16 %v1313, %v1313
  %v1316 = vsel %vm364, %v1314, 0
  %1318 = vmatpush.bf16.msra.mxu0 0
  %1319 = vmatpush.bf16.msra.mxu0 0
  %1320 = vmatpush.bf16.msra.mxu0 0
  %1321 = vmatpush.bf16.msra.mxu0 0
  %1322 = vmatpush.bf16.msra.mxu0 0
  %1323 = vmatpush.bf16.msra.mxu0 0
  %1324 = vmatpush.bf16.msra.mxu0 0
  %1325 = vmatpush.bf16.msra.mxu0 %v356
  %1326 = vmatmul.bf16.gmra.mxu0 %v1316
  %v1327 = vpop.f32.mrf.mxu0
  %v1328 = vadd.f32 %v1258, %v1327
  %v1329 = vpop.f32.mrf.mxu0
  %1330 = vdwg.mxu0
  %1331 = vmatpush.bf16.msra.mxu0 0
  %1332 = vmatpush.bf16.msra.mxu0 0
  %1333 = vmatpush.bf16.msra.mxu0 0
  %1334 = vmatpush.bf16.msra.mxu0 0
  %1335 = vmatpush.bf16.msra.mxu0 0
  %1336 = vmatpush.bf16.msra.mxu0 0
  %1337 = vmatpush.bf16.msra.mxu0 0
  %1338 = vmatpush.bf16.msra.mxu0 %v357
  %1339 = vmatmul.bf16.gmra.mxu0 %v1316
  %v1340 = vpop.f32.mrf.mxu0
  %v1341 = vadd.f32 %v1271, %v1340
  %v1342 = vpop.f32.mrf.mxu0
  %1343 = vdwg.mxu0
  %1344 = vmatpush.bf16.msra.mxu0 0
  %1345 = vmatpush.bf16.msra.mxu0 0
  %1346 = vmatpush.bf16.msra.mxu0 0
  %1347 = vmatpush.bf16.msra.mxu0 0
  %1348 = vmatpush.bf16.msra.mxu0 0
  %1349 = vmatpush.bf16.msra.mxu0 0
  %1350 = vmatpush.bf16.msra.mxu0 0
  %1351 = vmatpush.bf16.msra.mxu0 %v358
  %1352 = vmatmul.bf16.gmra.mxu0 %v1316
  %v1353 = vpop.f32.mrf.mxu0
  %v1354 = vadd.f32 %v1284, %v1353
  %v1355 = vpop.f32.mrf.mxu0
  %1356 = vdwg.mxu0
  %1357 = vmatpush.bf16.msra.mxu0 0
  %1358 = vmatpush.bf16.msra.mxu0 0
  %1359 = vmatpush.bf16.msra.mxu0 0
  %1360 = vmatpush.bf16.msra.mxu0 0
  %1361 = vmatpush.bf16.msra.mxu0 0
  %1362 = vmatpush.bf16.msra.mxu0 0
  %1363 = vmatpush.bf16.msra.mxu0 0
  %1364 = vmatpush.bf16.msra.mxu0 %v359
  %1365 = vmatmul.bf16.gmra.mxu0 %v1316
  %v1366 = vpop.f32.mrf.mxu0
  %v1367 = vadd.f32 %v1297, %v1366
  %v1368 = vpop.f32.mrf.mxu0
  %1369 = vdwg.mxu0
  %v1370 = vadd.f32 %v1328, %v70
  %v1371 = vadd.f32 %v1341, %v71
  %v1372 = vadd.f32 %v1354, %v72
  %v1373 = vadd.f32 %v1367, %v73
  %v1374 = vxor.u32 %v1370, 2147483648
  %v1375 = vmul.f32 %v1374, 1.442695
  %v1376 = vpow.pop %v1375
  %v1377 = vadd.f32 %v1376, 1.0
  %v1378 = vrcp.pop %v1377
  %v1379 = vmul.f32 %v1377, %v1378
  %v1380 = vsub.f32 1.0, %v1379
  %v1381 = vmul.f32 %v1378, %v1380
  %v1382 = vadd.f32 %v1378, %v1381
  %vm1383 = vweird.f32 %v1377
  %vm1384 = vweird.f32 %v1378
  %vm1385 = vmor %vm1383, %vm1384
  %v1386 = vsel %vm1385, %v1378, %v1382
  %v1387 = vand.u32 2147483647, %v1377
  %vm1388 = vcmp.eq.f32.partialorder %v1387, 8.507059e+37
  %v1389 = vand.u32 %v1377, 2147483648
  %v1390 = vor.u32 1.1754944e-38, %v1389
  %v1391 = vsel %vm1388, %v1390, %v1386
  %v1392 = vmul.f32 1.0, %v1391
  %v1393 = vxor.u32 %v1371, 2147483648
  %v1394 = vmul.f32 %v1393, 1.442695
  %v1395 = vpow.pop %v1394
  %v1396 = vadd.f32 %v1395, 1.0
  %v1397 = vrcp.pop %v1396
  %v1398 = vmul.f32 %v1396, %v1397
  %v1399 = vsub.f32 1.0, %v1398
  %v1400 = vmul.f32 %v1397, %v1399
  %v1401 = vadd.f32 %v1397, %v1400
  %vm1402 = vweird.f32 %v1396
  %vm1403 = vweird.f32 %v1397
  %vm1404 = vmor %vm1402, %vm1403
  %v1405 = vsel %vm1404, %v1397, %v1401
  %v1406 = vand.u32 2147483647, %v1396
  %vm1407 = vcmp.eq.f32.partialorder %v1406, 8.507059e+37
  %v1408 = vand.u32 %v1396, 2147483648
  %v1409 = vor.u32 1.1754944e-38, %v1408
  %v1410 = vsel %vm1407, %v1409, %v1405
  %v1411 = vmul.f32 1.0, %v1410
  %v1412 = vtanh.pop %v1372
  %v1413 = vxor.u32 %v1373, 2147483648
  %v1414 = vmul.f32 %v1413, 1.442695
  %v1415 = vpow.pop %v1414
  %v1416 = vadd.f32 %v1415, 1.0
  %v1417 = vrcp.pop %v1416
  %v1418 = vmul.f32 %v1416, %v1417
  %v1419 = vsub.f32 1.0, %v1418
  %v1420 = vmul.f32 %v1417, %v1419
  %v1421 = vadd.f32 %v1417, %v1420
  %vm1422 = vweird.f32 %v1416
  %vm1423 = vweird.f32 %v1417
  %vm1424 = vmor %vm1422, %vm1423
  %v1425 = vsel %vm1424, %v1417, %v1421
  %v1426 = vand.u32 2147483647, %v1416
  %vm1427 = vcmp.eq.f32.partialorder %v1426, 8.507059e+37
  %v1428 = vand.u32 %v1416, 2147483648
  %v1429 = vor.u32 1.1754944e-38, %v1428
  %v1430 = vsel %vm1427, %v1429, %v1425
  %v1431 = vmul.f32 1.0, %v1430
  %v1432 = vmul.f32 %v1411, %v1244
  %v1433 = vmul.f32 %v1392, %v1412
  %v1434 = vadd.f32 %v1432, %v1433
  %v1435 = vtanh.pop %v1434
  %v1436 = vmul.f32 %v1431, %v1435
  %v1437 = vpack.c.bf16 %v1436, %v1436
  %1438 = vmatpush.bf16.msra.mxu0 %v202
  %1439 = vmatpush.bf16.msra.mxu0 %v198
  %1440 = vmatpush.bf16.msra.mxu0 %v194
  %1441 = vmatpush.bf16.msra.mxu0 %v190
  %1442 = vmatpush.bf16.msra.mxu0 %v186
  %1443 = vmatpush.bf16.msra.mxu0 %v182
  %1444 = vmatpush.bf16.msra.mxu0 %v178
  %1445 = vmatpush.bf16.msra.mxu0 %v174
  %1446 = vmatmul.bf16.gmra.mxu0 %v1437
  %v1447 = vpop.f32.mrf.mxu0
  %v1448 = vadd.f32 0.0, %v1447
  %v1449 = vpop.f32.mrf.mxu0
  %1450 = vdwg.mxu0
  %1451 = vmatpush.bf16.msra.mxu0 %v203
  %1452 = vmatpush.bf16.msra.mxu0 %v199
  %1453 = vmatpush.bf16.msra.mxu0 %v195
  %1454 = vmatpush.bf16.msra.mxu0 %v191
  %1455 = vmatpush.bf16.msra.mxu0 %v187
  %1456 = vmatpush.bf16.msra.mxu0 %v183
  %1457 = vmatpush.bf16.msra.mxu0 %v179
  %1458 = vmatpush.bf16.msra.mxu0 %v175
  %1459 = vmatmul.bf16.gmra.mxu0 %v1437
  %v1460 = vpop.f32.mrf.mxu0
  %v1461 = vadd.f32 0.0, %v1460
  %v1462 = vpop.f32.mrf.mxu0
  %1463 = vdwg.mxu0
  %1464 = vmatpush.bf16.msra.mxu0 %v204
  %1465 = vmatpush.bf16.msra.mxu0 %v200
  %1466 = vmatpush.bf16.msra.mxu0 %v196
  %1467 = vmatpush.bf16.msra.mxu0 %v192
  %1468 = vmatpush.bf16.msra.mxu0 %v188
  %1469 = vmatpush.bf16.msra.mxu0 %v184
  %1470 = vmatpush.bf16.msra.mxu0 %v180
  %1471 = vmatpush.bf16.msra.mxu0 %v176
  %1472 = vmatmul.bf16.gmra.mxu0 %v1437
  %v1473 = vpop.f32.mrf.mxu0
  %v1474 = vadd.f32 0.0, %v1473
  %v1475 = vpop.f32.mrf.mxu0
  %1476 = vdwg.mxu0
  %1477 = vmatpush.bf16.msra.mxu0 %v205
  %1478 = vmatpush.bf16.msra.mxu0 %v201
  %1479 = vmatpush.bf16.msra.mxu0 %v197
  %1480 = vmatpush.bf16.msra.mxu0 %v193
  %1481 = vmatpush.bf16.msra.mxu0 %v189
  %1482 = vmatpush.bf16.msra.mxu0 %v185
  %1483 = vmatpush.bf16.msra.mxu0 %v181
  %1484 = vmatpush.bf16.msra.mxu0 %v177
  %1485 = vmatmul.bf16.gmra.mxu0 %v1437
  %v1486 = vpop.f32.mrf.mxu0
  %v1487 = vadd.f32 0.0, %v1486
  %v1488 = vpop.f32.mrf.mxu0
  %1489 = vdwg.mxu0
  %v1490 = vrot.slane %v314, 6
  %v1491 = vrot.slane %v315, 5
  %v1492 = vsel %vm323, %v1491, %v1490
  %v1493 = vrot.slane %v316, 4
  %v1494 = vsel %vm326, %v1493, %v1492
  %v1495 = vrot.slane %v317, 3
  %v1496 = vsel %vm329, %v1495, %v1494
  %v1497 = vrot.slane %v318, 2
  %v1498 = vsel %vm332, %v1497, %v1496
  %v1499 = vrot.slane %v319, 1
  %v1500 = vsel %vm335, %v1499, %v1498
  %v1501 = vsel %vm338, %v320, %v1500
  %v1502 = vrot.slane %v321, 7
  %v1503 = vsel %vm341, %v1502, %v1501
  %v1504 = vpack.c.b16 %v1503, %v1503
  %v1506 = vsel %vm364, %v1504, 0
  %1508 = vmatpush.bf16.msra.mxu0 0
  %1509 = vmatpush.bf16.msra.mxu0 0
  %1510 = vmatpush.bf16.msra.mxu0 0
  %1511 = vmatpush.bf16.msra.mxu0 0
  %1512 = vmatpush.bf16.msra.mxu0 0
  %1513 = vmatpush.bf16.msra.mxu0 0
  %1514 = vmatpush.bf16.msra.mxu0 0
  %1515 = vmatpush.bf16.msra.mxu0 %v356
  %1516 = vmatmul.bf16.gmra.mxu0 %v1506
  %v1517 = vpop.f32.mrf.mxu0
  %v1518 = vadd.f32 %v1448, %v1517
  %v1519 = vpop.f32.mrf.mxu0
  %1520 = vdwg.mxu0
  %1521 = vmatpush.bf16.msra.mxu0 0
  %1522 = vmatpush.bf16.msra.mxu0 0
  %1523 = vmatpush.bf16.msra.mxu0 0
  %1524 = vmatpush.bf16.msra.mxu0 0
  %1525 = vmatpush.bf16.msra.mxu0 0
  %1526 = vmatpush.bf16.msra.mxu0 0
  %1527 = vmatpush.bf16.msra.mxu0 0
  %1528 = vmatpush.bf16.msra.mxu0 %v357
  %1529 = vmatmul.bf16.gmra.mxu0 %v1506
  %v1530 = vpop.f32.mrf.mxu0
  %v1531 = vadd.f32 %v1461, %v1530
  %v1532 = vpop.f32.mrf.mxu0
  %1533 = vdwg.mxu0
  %1534 = vmatpush.bf16.msra.mxu0 0
  %1535 = vmatpush.bf16.msra.mxu0 0
  %1536 = vmatpush.bf16.msra.mxu0 0
  %1537 = vmatpush.bf16.msra.mxu0 0
  %1538 = vmatpush.bf16.msra.mxu0 0
  %1539 = vmatpush.bf16.msra.mxu0 0
  %1540 = vmatpush.bf16.msra.mxu0 0
  %1541 = vmatpush.bf16.msra.mxu0 %v358
  %1542 = vmatmul.bf16.gmra.mxu0 %v1506
  %v1543 = vpop.f32.mrf.mxu0
  %v1544 = vadd.f32 %v1474, %v1543
  %v1545 = vpop.f32.mrf.mxu0
  %1546 = vdwg.mxu0
  %1547 = vmatpush.bf16.msra.mxu0 0
  %1548 = vmatpush.bf16.msra.mxu0 0
  %1549 = vmatpush.bf16.msra.mxu0 0
  %1550 = vmatpush.bf16.msra.mxu0 0
  %1551 = vmatpush.bf16.msra.mxu0 0
  %1552 = vmatpush.bf16.msra.mxu0 0
  %1553 = vmatpush.bf16.msra.mxu0 0
  %1554 = vmatpush.bf16.msra.mxu0 %v359
  %1555 = vmatmul.bf16.gmra.mxu0 %v1506
  %v1556 = vpop.f32.mrf.mxu0
  %v1557 = vadd.f32 %v1487, %v1556
  %v1558 = vpop.f32.mrf.mxu0
  %1559 = vdwg.mxu0
  %v1560 = vadd.f32 %v1518, %v70
  %v1561 = vadd.f32 %v1531, %v71
  %v1562 = vadd.f32 %v1544, %v72
  %v1563 = vadd.f32 %v1557, %v73
  %v1564 = vxor.u32 %v1560, 2147483648
  %v1565 = vmul.f32 %v1564, 1.442695
  %v1566 = vpow.pop %v1565
  %v1567 = vadd.f32 %v1566, 1.0
  %v1568 = vrcp.pop %v1567
  %v1569 = vmul.f32 %v1567, %v1568
  %v1570 = vsub.f32 1.0, %v1569
  %v1571 = vmul.f32 %v1568, %v1570
  %v1572 = vadd.f32 %v1568, %v1571
  %vm1573 = vweird.f32 %v1567
  %vm1574 = vweird.f32 %v1568
  %vm1575 = vmor %vm1573, %vm1574
  %v1576 = vsel %vm1575, %v1568, %v1572
  %v1577 = vand.u32 2147483647, %v1567
  %vm1578 = vcmp.eq.f32.partialorder %v1577, 8.507059e+37
  %v1579 = vand.u32 %v1567, 2147483648
  %v1580 = vor.u32 1.1754944e-38, %v1579
  %v1581 = vsel %vm1578, %v1580, %v1576
  %v1582 = vmul.f32 1.0, %v1581
  %v1583 = vxor.u32 %v1561, 2147483648
  %v1584 = vmul.f32 %v1583, 1.442695
  %v1585 = vpow.pop %v1584
  %v1586 = vadd.f32 %v1585, 1.0
  %v1587 = vrcp.pop %v1586
  %v1588 = vmul.f32 %v1586, %v1587
  %v1589 = vsub.f32 1.0, %v1588
  %v1590 = vmul.f32 %v1587, %v1589
  %v1591 = vadd.f32 %v1587, %v1590
  %vm1592 = vweird.f32 %v1586
  %vm1593 = vweird.f32 %v1587
  %vm1594 = vmor %vm1592, %vm1593
  %v1595 = vsel %vm1594, %v1587, %v1591
  %v1596 = vand.u32 2147483647, %v1586
  %vm1597 = vcmp.eq.f32.partialorder %v1596, 8.507059e+37
  %v1598 = vand.u32 %v1586, 2147483648
  %v1599 = vor.u32 1.1754944e-38, %v1598
  %v1600 = vsel %vm1597, %v1599, %v1595
  %v1601 = vmul.f32 1.0, %v1600
  %v1602 = vtanh.pop %v1562
  %v1603 = vxor.u32 %v1563, 2147483648
  %v1604 = vmul.f32 %v1603, 1.442695
  %v1605 = vpow.pop %v1604
  %v1606 = vadd.f32 %v1605, 1.0
  %v1607 = vrcp.pop %v1606
  %v1608 = vmul.f32 %v1606, %v1607
  %v1609 = vsub.f32 1.0, %v1608
  %v1610 = vmul.f32 %v1607, %v1609
  %v1611 = vadd.f32 %v1607, %v1610
  %vm1612 = vweird.f32 %v1606
  %vm1613 = vweird.f32 %v1607
  %vm1614 = vmor %vm1612, %vm1613
  %v1615 = vsel %vm1614, %v1607, %v1611
  %v1616 = vand.u32 2147483647, %v1606
  %vm1617 = vcmp.eq.f32.partialorder %v1616, 8.507059e+37
  %v1618 = vand.u32 %v1606, 2147483648
  %v1619 = vor.u32 1.1754944e-38, %v1618
  %v1620 = vsel %vm1617, %v1619, %v1615
  %v1621 = vmul.f32 1.0, %v1620
  %v1622 = vmul.f32 %v1601, %v1434
  %v1623 = vmul.f32 %v1582, %v1602
  %v1624 = vadd.f32 %v1622, %v1623
  %v1625 = vtanh.pop %v1624
  %v1626 = vmul.f32 %v1621, %v1625
  %v1627 = vpack.c.bf16 %v1626, %v1626
  %1628 = vmatpush.bf16.msra.mxu0 %v202
  %1629 = vmatpush.bf16.msra.mxu0 %v198
  %1630 = vmatpush.bf16.msra.mxu0 %v194
  %1631 = vmatpush.bf16.msra.mxu0 %v190
  %1632 = vmatpush.bf16.msra.mxu0 %v186
  %1633 = vmatpush.bf16.msra.mxu0 %v182
  %1634 = vmatpush.bf16.msra.mxu0 %v178
  %1635 = vmatpush.bf16.msra.mxu0 %v174
  %1636 = vmatmul.bf16.gmra.mxu0 %v1627
  %v1637 = vpop.f32.mrf.mxu0
  %v1638 = vadd.f32 0.0, %v1637
  %v1639 = vpop.f32.mrf.mxu0
  %1640 = vdwg.mxu0
  %1641 = vmatpush.bf16.msra.mxu0 %v203
  %1642 = vmatpush.bf16.msra.mxu0 %v199
  %1643 = vmatpush.bf16.msra.mxu0 %v195
  %1644 = vmatpush.bf16.msra.mxu0 %v191
  %1645 = vmatpush.bf16.msra.mxu0 %v187
  %1646 = vmatpush.bf16.msra.mxu0 %v183
  %1647 = vmatpush.bf16.msra.mxu0 %v179
  %1648 = vmatpush.bf16.msra.mxu0 %v175
  %1649 = vmatmul.bf16.gmra.mxu0 %v1627
  %v1650 = vpop.f32.mrf.mxu0
  %v1651 = vadd.f32 0.0, %v1650
  %v1652 = vpop.f32.mrf.mxu0
  %1653 = vdwg.mxu0
  %1654 = vmatpush.bf16.msra.mxu0 %v204
  %1655 = vmatpush.bf16.msra.mxu0 %v200
  %1656 = vmatpush.bf16.msra.mxu0 %v196
  %1657 = vmatpush.bf16.msra.mxu0 %v192
  %1658 = vmatpush.bf16.msra.mxu0 %v188
  %1659 = vmatpush.bf16.msra.mxu0 %v184
  %1660 = vmatpush.bf16.msra.mxu0 %v180
  %1661 = vmatpush.bf16.msra.mxu0 %v176
  %1662 = vmatmul.bf16.gmra.mxu0 %v1627
  %v1663 = vpop.f32.mrf.mxu0
  %v1664 = vadd.f32 0.0, %v1663
  %v1665 = vpop.f32.mrf.mxu0
  %1666 = vdwg.mxu0
  %1667 = vmatpush.bf16.msra.mxu0 %v205
  %1668 = vmatpush.bf16.msra.mxu0 %v201
  %1669 = vmatpush.bf16.msra.mxu0 %v197
  %1670 = vmatpush.bf16.msra.mxu0 %v193
  %1671 = vmatpush.bf16.msra.mxu0 %v189
  %1672 = vmatpush.bf16.msra.mxu0 %v185
  %1673 = vmatpush.bf16.msra.mxu0 %v181
  %1674 = vmatpush.bf16.msra.mxu0 %v177
  %1675 = vmatmul.bf16.gmra.mxu0 %v1627
  %v1676 = vpop.f32.mrf.mxu0
  %v1677 = vadd.f32 0.0, %v1676
  %v1678 = vpop.f32.mrf.mxu0
  %1679 = vdwg.mxu0
  %v1680 = vrot.slane %v314, 7
  %v1681 = vrot.slane %v315, 6
  %v1682 = vsel %vm323, %v1681, %v1680
  %v1683 = vrot.slane %v316, 5
  %v1684 = vsel %vm326, %v1683, %v1682
  %v1685 = vrot.slane %v317, 4
  %v1686 = vsel %vm329, %v1685, %v1684
  %v1687 = vrot.slane %v318, 3
  %v1688 = vsel %vm332, %v1687, %v1686
  %v1689 = vrot.slane %v319, 2
  %v1690 = vsel %vm335, %v1689, %v1688
  %v1691 = vrot.slane %v320, 1
  %v1692 = vsel %vm338, %v1691, %v1690
  %v1693 = vsel %vm341, %v321, %v1692
  %v1694 = vpack.c.b16 %v1693, %v1693
  %v1696 = vsel %vm364, %v1694, 0
  %1698 = vmatpush.bf16.msra.mxu0 0
  %1699 = vmatpush.bf16.msra.mxu0 0
  %1700 = vmatpush.bf16.msra.mxu0 0
  %1701 = vmatpush.bf16.msra.mxu0 0
  %1702 = vmatpush.bf16.msra.mxu0 0
  %1703 = vmatpush.bf16.msra.mxu0 0
  %1704 = vmatpush.bf16.msra.mxu0 0
  %1705 = vmatpush.bf16.msra.mxu0 %v356
  %1706 = vmatmul.bf16.gmra.mxu0 %v1696
  %v1707 = vpop.f32.mrf.mxu0
  %v1708 = vadd.f32 %v1638, %v1707
  %v1709 = vpop.f32.mrf.mxu0
  %1710 = vdwg.mxu0
  %1711 = vmatpush.bf16.msra.mxu0 0
  %1712 = vmatpush.bf16.msra.mxu0 0
  %1713 = vmatpush.bf16.msra.mxu0 0
  %1714 = vmatpush.bf16.msra.mxu0 0
  %1715 = vmatpush.bf16.msra.mxu0 0
  %1716 = vmatpush.bf16.msra.mxu0 0
  %1717 = vmatpush.bf16.msra.mxu0 0
  %1718 = vmatpush.bf16.msra.mxu0 %v357
  %1719 = vmatmul.bf16.gmra.mxu0 %v1696
  %v1720 = vpop.f32.mrf.mxu0
  %v1721 = vadd.f32 %v1651, %v1720
  %v1722 = vpop.f32.mrf.mxu0
  %1723 = vdwg.mxu0
  %1724 = vmatpush.bf16.msra.mxu0 0
  %1725 = vmatpush.bf16.msra.mxu0 0
  %1726 = vmatpush.bf16.msra.mxu0 0
  %1727 = vmatpush.bf16.msra.mxu0 0
  %1728 = vmatpush.bf16.msra.mxu0 0
  %1729 = vmatpush.bf16.msra.mxu0 0
  %1730 = vmatpush.bf16.msra.mxu0 0
  %1731 = vmatpush.bf16.msra.mxu0 %v358
  %1732 = vmatmul.bf16.gmra.mxu0 %v1696
  %v1733 = vpop.f32.mrf.mxu0
  %v1734 = vadd.f32 %v1664, %v1733
  %v1735 = vpop.f32.mrf.mxu0
  %1736 = vdwg.mxu0
  %1737 = vmatpush.bf16.msra.mxu0 0
  %1738 = vmatpush.bf16.msra.mxu0 0
  %1739 = vmatpush.bf16.msra.mxu0 0
  %1740 = vmatpush.bf16.msra.mxu0 0
  %1741 = vmatpush.bf16.msra.mxu0 0
  %1742 = vmatpush.bf16.msra.mxu0 0
  %1743 = vmatpush.bf16.msra.mxu0 0
  %1744 = vmatpush.bf16.msra.mxu0 %v359
  %1745 = vmatmul.bf16.gmra.mxu0 %v1696
  %v1746 = vpop.f32.mrf.mxu0
  %v1747 = vadd.f32 %v1677, %v1746
  %v1748 = vpop.f32.mrf.mxu0
  %1749 = vdwg.mxu0
  %v1750 = vadd.f32 %v1708, %v70
  %v1751 = vadd.f32 %v1721, %v71
  %v1752 = vadd.f32 %v1734, %v72
  %v1753 = vadd.f32 %v1747, %v73
  %v1754 = vxor.u32 %v1750, 2147483648
  %v1755 = vmul.f32 %v1754, 1.442695
  %v1756 = vpow.pop %v1755
  %v1757 = vadd.f32 %v1756, 1.0
  %v1758 = vrcp.pop %v1757
  %v1759 = vmul.f32 %v1757, %v1758
  %v1760 = vsub.f32 1.0, %v1759
  %v1761 = vmul.f32 %v1758, %v1760
  %v1762 = vadd.f32 %v1758, %v1761
  %vm1763 = vweird.f32 %v1757
  %vm1764 = vweird.f32 %v1758
  %vm1765 = vmor %vm1763, %vm1764
  %v1766 = vsel %vm1765, %v1758, %v1762
  %v1767 = vand.u32 2147483647, %v1757
  %vm1768 = vcmp.eq.f32.partialorder %v1767, 8.507059e+37
  %v1769 = vand.u32 %v1757, 2147483648
  %v1770 = vor.u32 1.1754944e-38, %v1769
  %v1771 = vsel %vm1768, %v1770, %v1766
  %v1772 = vmul.f32 1.0, %v1771
  %v1773 = vxor.u32 %v1751, 2147483648
  %v1774 = vmul.f32 %v1773, 1.442695
  %v1775 = vpow.pop %v1774
  %v1776 = vadd.f32 %v1775, 1.0
  %v1777 = vrcp.pop %v1776
  %v1778 = vmul.f32 %v1776, %v1777
  %v1779 = vsub.f32 1.0, %v1778
  %v1780 = vmul.f32 %v1777, %v1779
  %v1781 = vadd.f32 %v1777, %v1780
  %vm1782 = vweird.f32 %v1776
  %vm1783 = vweird.f32 %v1777
  %vm1784 = vmor %vm1782, %vm1783
  %v1785 = vsel %vm1784, %v1777, %v1781
  %v1786 = vand.u32 2147483647, %v1776
  %vm1787 = vcmp.eq.f32.partialorder %v1786, 8.507059e+37
  %v1788 = vand.u32 %v1776, 2147483648
  %v1789 = vor.u32 1.1754944e-38, %v1788
  %v1790 = vsel %vm1787, %v1789, %v1785
  %v1791 = vmul.f32 1.0, %v1790
  %v1792 = vtanh.pop %v1752
  %v1793 = vxor.u32 %v1753, 2147483648
  %v1794 = vmul.f32 %v1793, 1.442695
  %v1795 = vpow.pop %v1794
  %v1796 = vadd.f32 %v1795, 1.0
  %v1797 = vrcp.pop %v1796
  %v1798 = vmul.f32 %v1796, %v1797
  %v1799 = vsub.f32 1.0, %v1798
  %v1800 = vmul.f32 %v1797, %v1799
  %v1801 = vadd.f32 %v1797, %v1800
  %vm1802 = vweird.f32 %v1796
  %vm1803 = vweird.f32 %v1797
  %vm1804 = vmor %vm1802, %vm1803
  %v1805 = vsel %vm1804, %v1797, %v1801
  %v1806 = vand.u32 2147483647, %v1796
  %vm1807 = vcmp.eq.f32.partialorder %v1806, 8.507059e+37
  %v1808 = vand.u32 %v1796, 2147483648
  %v1809 = vor.u32 1.1754944e-38, %v1808
  %v1810 = vsel %vm1807, %v1809, %v1805
  %v1811 = vmul.f32 1.0, %v1810
  %v1812 = vmul.f32 %v1791, %v1624
  %v1813 = vmul.f32 %v1772, %v1792
  %v1814 = vadd.f32 %v1812, %v1813
  %v1815 = vtanh.pop %v1814
  %v1816 = vmul.f32 %v1811, %v1815
  %v1817 = vpack.c.bf16 %v1816, %v1816
  %v1818 = vld [vmem:[%s4] sm:$0xf]
  %v1819 = vld [vmem:[%s4 + $0x4] sm:$0xf]
  %v1820 = vld [vmem:[%s4 + $0x8] sm:$0xf]
  %v1821 = vld [vmem:[%s4 + $0xc] sm:$0xf]
  %v1822 = vld [vmem:[%s4 + $0x10] sm:$0xf]
  %v1823 = vld [vmem:[%s4 + $0x14] sm:$0xf]
  %v1824 = vld [vmem:[%s4 + $0x18] sm:$0xf]
  %v1825 = vld [vmem:[%s4 + $0x1c] sm:$0xf]
  %v1826 = vld [vmem:[%s4 + $0x20] sm:$0xf]
  %v1827 = vld [vmem:[%s4 + $0x24] sm:$0xf]
  %v1828 = vld [vmem:[%s4 + $0x28] sm:$0xf]
  %v1829 = vld [vmem:[%s4 + $0x2c] sm:$0xf]
  %v1830 = vld [vmem:[%s4 + $0x30] sm:$0xf]
  %v1831 = vld [vmem:[%s4 + $0x34] sm:$0xf]
  %v1832 = vld [vmem:[%s4 + $0x38] sm:$0xf]
  %v1833 = vld [vmem:[%s4 + $0x3c] sm:$0xf]
  %v1834 = vld [vmem:[%s5] sm:$0x1]
  %v1836 = vperm.slane %v1834, 0
  %v1854 = vunpack.c.l.b16 %v1818
  %v1855 = vunpack.c.l.b16 %v1819
  %v1856 = vunpack.c.l.b16 %v1820
  %v1857 = vunpack.c.l.b16 %v1821
  %v1858 = vunpack.c.l.b16 %v1822
  %v1859 = vunpack.c.l.b16 %v1823
  %v1860 = vunpack.c.l.b16 %v1824
  %v1861 = vunpack.c.l.b16 %v1825
  %v1862 = vunpack.c.l.b16 %v1826
  %v1863 = vunpack.c.l.b16 %v1827
  %v1864 = vunpack.c.l.b16 %v1828
  %v1865 = vunpack.c.l.b16 %v1829
  %v1866 = vunpack.c.l.b16 %v1830
  %v1867 = vunpack.c.l.b16 %v1831
  %v1868 = vunpack.c.l.b16 %v1832
  %v1869 = vunpack.c.l.b16 %v1833
  %v1870 = vpack.c.b16 %v1855, %v1854
  %v1871 = vpack.c.b16 %v1857, %v1856
  %v1872 = vpack.c.b16 %v1859, %v1858
  %v1873 = vpack.c.b16 %v1861, %v1860
  %v1874 = vpack.c.b16 %v1863, %v1862
  %v1875 = vpack.c.b16 %v1865, %v1864
  %v1876 = vpack.c.b16 %v1867, %v1866
  %v1877 = vpack.c.b16 %v1869, %v1868
  %1886 = vmatpush.bf16.msra.mxu0 %v1877
  %1887 = vmatpush.bf16.msra.mxu0 %v1876
  %1888 = vmatpush.bf16.msra.mxu0 %v1875
  %1889 = vmatpush.bf16.msra.mxu0 %v1874
  %1890 = vmatpush.bf16.msra.mxu0 %v1873
  %1891 = vmatpush.bf16.msra.mxu0 %v1872
  %1892 = vmatpush.bf16.msra.mxu0 %v1871
  %1893 = vmatpush.bf16.msra.mxu0 %v1870
  %1894 = vmatmul.bf16.gmra.mxu0 %v1817
  %v1895 = vpop.f32.mrf.mxu0
  %v1896 = vadd.f32 %v1836, %v1895
  %v1897 = vpop.f32.mrf.mxu0
  %1898 = vdwg.mxu0
  %v1899 = vxor.u32 %v1896, 2147483648
  %v1900 = vmul.f32 %v1899, 1.442695
  %v1901 = vpow.pop %v1900
  %v1902 = vadd.f32 %v1901, 1.0
  %v1903 = vrcp.pop %v1902
  %v1904 = vmul.f32 %v1902, %v1903
  %v1905 = vsub.f32 1.0, %v1904
  %v1906 = vmul.f32 %v1903, %v1905
  %v1907 = vadd.f32 %v1903, %v1906
  %vm1908 = vweird.f32 %v1902
  %vm1909 = vweird.f32 %v1903
  %vm1910 = vmor %vm1908, %vm1909
  %v1911 = vsel %vm1910, %v1903, %v1907
  %v1912 = vand.u32 2147483647, %v1902
  %vm1913 = vcmp.eq.f32.partialorder %v1912, 8.507059e+37
  %v1914 = vand.u32 %v1902, 2147483648
  %v1915 = vor.u32 1.1754944e-38, %v1914
  %v1916 = vsel %vm1913, %v1915, %v1911
  %v1917 = vmul.f32 1.0, %v1916
  %1918 = vst [vmem:[%s6] sm:$0xff] %v1917
  // Predicated region
  $region26: #{lstm_model_forward.1} parent=0 // pred_check
    _
  $region27: #{lstm_model_forward.1} parent=0 // pred_check_branch
    %1920 = sbr.rel (0) target = $region29
  $region28: #{lstm_model_forward.1} parent=0 // pred_region
    _
  $region29: #{lstm_model_forward.1} parent=0 // pred_fallthru
    _
  // Predicated region
  $region30: #{lstm_model_forward.1} parent=0 // pred_check
    _
  $region31: #{lstm_model_forward.1} parent=0 // pred_check_branch
    %1922 = sbr.rel (0) target = $region33
  $region32: #{lstm_model_forward.1} parent=0 // pred_region
    _
  $region33: #{lstm_model_forward.1} parent=0 // pred_fallthru
    _

</llo_original>
